<compile_context>
chip_gen: v7x
topology: tpu7x:2x2x1
jax: 0.10.0
libtpu: 0.0.40
codegen_flags: <defaults>
</compile_context>

<pallas_src>
import functools
import math

import jax
import jax.numpy as jnp
from jax.experimental import pallas as pl
from jax.experimental.pallas import tpu as pltpu


def _mha_kernel(q_ref, k_ref, v_ref,
                wq_ref, bq_ref,
                wk_ref, bk_ref,
                wv_ref, bv_ref,
                wo_ref, bo_ref,
                o_ref,
                cat_ref,
                *, batch_tile, seq_len, num_heads, dim_q, dim_k, dim_in):
    """Grid = (B // Bt,).  All heads + Bt batches fused into one grid step."""
    Bt, S, H = batch_tile, seq_len, num_heads

    # Flatten (Bt, S, dim_in) -> (Bt*S, dim_in): sublane-only merge (free).
    # bf16 operands, f32 accumulation for every matmul.
    xq = q_ref[...].reshape(Bt * S, dim_in).astype(jnp.bfloat16)
    xk = k_ref[...].reshape(Bt * S, dim_in).astype(jnp.bfloat16)
    xv = v_ref[...].reshape(Bt * S, dim_in).astype(jnp.bfloat16)

    # Head-fused, lane-dense projections (weights pre-transposed host-side,
    # 1/sqrt(dim_q) already folded into wq/bq).
    q_all = (jnp.dot(xq, wq_ref[...], preferred_element_type=jnp.float32)
             + bq_ref[...]).reshape(Bt, S, H * dim_q)
    k_all = (jnp.dot(xk, wk_ref[...], preferred_element_type=jnp.float32)
             + bk_ref[...]).reshape(Bt, S, H * dim_k)
    v_all = (jnp.dot(xv, wv_ref[...], preferred_element_type=jnp.float32)
             + bv_ref[...]).reshape(Bt, S, H * dim_k)

    # Static head loop; each head's result goes straight into the VMEM slab
    # (no jnp.concatenate copy; bounds the live activation set per head).
    for h in range(H):
        qh = q_all[:, :, h * dim_q:(h + 1) * dim_q].astype(jnp.bfloat16)
        kh = k_all[:, :, h * dim_k:(h + 1) * dim_k].astype(jnp.bfloat16)
        vh = v_all[:, :, h * dim_k:(h + 1) * dim_k].astype(jnp.bfloat16)

        # (Bt, S, S) scores; Q is already pre-scaled via the packed weights.
        s = jnp.einsum('bqd,bkd->bqk', qh, kh,
                       preferred_element_type=jnp.float32)
        s = s - jnp.max(s, axis=-1, keepdims=True)
        # TODO(synk): on v6e/v7x the exp could run in bf16 (~2x EUP throughput).
        e = jnp.exp(s)
        denom = jnp.sum(e, axis=-1, keepdims=True)

        # Deferred normalization: PV matmul on un-normalized exp, then scale
        # the (Bt, S, dim_k) result (instead of the (Bt, S, S) probabilities).
        pv = jnp.einsum('bqk,bkd->bqd', e.astype(jnp.bfloat16), vh,
                        preferred_element_type=jnp.float32)
        cat_ref[:, :, h * dim_k:(h + 1) * dim_k] = (
            pv * pl.reciprocal(denom, approx=True))

    # concat(heads) + output linear == one lane-dense matmul from the slab.
    cat = cat_ref[...].reshape(Bt * S, H * dim_k).astype(jnp.bfloat16)
    out = (jnp.dot(cat, wo_ref[...], preferred_element_type=jnp.float32)
           + bo_ref[...])
    # TODO(synk): for dim_in < 128 a lane-dense (Bt, S*dim_in) out block would
    # avoid masked vst; kept (Bt, S, dim_in) to avoid an in-kernel relayout.
    o_ref[...] = out.reshape(Bt, S, dim_in).astype(o_ref.dtype)


def _pick_batch_tile(B, S, dim_in, num_heads, dim_q, dim_k,
                     budget_bytes=8 * 1024 * 1024):
    """Largest divisor of B whose per-step f32 activation footprint fits the budget."""
    per_batch = (4 * S * (3 * dim_in + num_heads * (dim_q + 3 * dim_k))
                 + 8 * S * S)
    cap = max(1, min(B, budget_bytes // max(per_batch, 1)))
    for cand in range(cap, 0, -1):
        if B % cand == 0:
            return cand
    return 1


def multi_head_attention(query, key, value, params, *,
                         num_heads, dim_q, dim_k, batch_tile=None):
    """query/key/value: (B, S, dim_in).  params: packed/pre-transposed weights."""
    B, S, dim_in = query.shape
    # Q.K^T contracts dim_q against dim_k (same requirement as the PyTorch bmm).
    assert dim_q == dim_k, "MultiHeadAttention requires dim_q == dim_k"

    wq, bq = params["wq"], params["bq"]   # (dim_in, H*dim_q) bf16, (1, H*dim_q) f32
    wk, bk = params["wk"], params["bk"]   # (dim_in, H*dim_k) bf16, (1, H*dim_k) f32
    wv, bv = params["wv"], params["bv"]   # (dim_in, H*dim_k) bf16, (1, H*dim_k) f32
    wo, bo = params["wo"], params["bo"]   # (H*dim_k, dim_in) bf16, (1, dim_in) f32

    Bt = batch_tile or _pick_batch_tile(B, S, dim_in, num_heads, dim_q, dim_k)
    assert B % Bt == 0, "batch_tile must divide batch"

    kernel = functools.partial(
        _mha_kernel, batch_tile=Bt, seq_len=S, num_heads=num_heads,
        dim_q=dim_q, dim_k=dim_k, dim_in=dim_in)

    io_spec = pl.BlockSpec((Bt, S, dim_in), lambda b: (b, 0, 0))

    def weight_spec(arr):
        nd = arr.ndim
        # Whole array, constant index map, single-buffered -> DMA'd once,
        # VMEM-resident, no useless second pipeline buffer.
        return pl.BlockSpec(arr.shape, lambda b, _nd=nd: (0,) * _nd,
                            pipeline_mode=pl.Buffered(1))

    return pl.pallas_call(
        kernel,
        out_shape=jax.ShapeDtypeStruct((B, S, dim_in), query.dtype),
        grid_spec=pltpu.PrefetchScalarGridSpec(
            num_scalar_prefetch=0,
            grid=(B // Bt,),
            in_specs=[
                io_spec,            # query
                io_spec,            # key
                io_spec,            # value
                weight_spec(wq), weight_spec(bq),
                weight_spec(wk), weight_spec(bk),
                weight_spec(wv), weight_spec(bv),
                weight_spec(wo), weight_spec(bo),
            ],
            out_specs=io_spec,
            scratch_shapes=[pltpu.VMEM((Bt, S, num_heads * dim_k), jnp.float32)],
        ),
        compiler_params=pltpu.CompilerParams(
            dimension_semantics=("parallel",),          # batch tiles shard across TCs
            vmem_limit_bytes=48 * 1024 * 1024),
    )(query, key, value, wq, bq, wk, bk, wv, bv, wo, bo)


def init_params(key, num_heads, dim_in, dim_q, dim_k):
    """Deterministic init matching PyTorch nn.Linear shapes, packed for the kernel."""
    ks = jax.random.split(key, 2)

    def lin(k, fan_out, fan_in):
        bound = 1.0 / math.sqrt(fan_in)
        kw, kb = jax.random.split(k)
        w = jax.random.uniform(kw, (fan_out, fan_in), jnp.float32, -bound, bound)
        b = jax.random.uniform(kb, (fan_out,), jnp.float32, -bound, bound)
        return w, b

    head_keys = jax.random.split(ks[0], num_heads * 3).reshape(num_heads, 3, 2)
    wq_l, bq_l, wk_l, bk_l, wv_l, bv_l = [], [], [], [], [], []
    for h in range(num_heads):
        w, b = lin(head_keys[h, 0], dim_q, dim_in); wq_l.append(w); bq_l.append(b)
        w, b = lin(head_keys[h, 1], dim_k, dim_in); wk_l.append(w); bk_l.append(b)
        w, b = lin(head_keys[h, 2], dim_k, dim_in); wv_l.append(w); bv_l.append(b)

    # final linear: weight (dim_in, H*dim_k), bias (dim_in,)
    w_out, b_out = lin(ks[1], dim_in, num_heads * dim_k)

    # Kernel layouts: pre-transposed, head-fused (x @ W form), bf16 weights,
    # f32 biases, 1/sqrt(dim_q) folded into the Q projection (host-side, free).
    scale = 1.0 / math.sqrt(dim_q)
    params = {
        "wq": (scale * jnp.concatenate([w.T for w in wq_l], axis=1)).astype(jnp.bfloat16),
        "bq": (scale * jnp.concatenate(bq_l))[None, :],                 # (1, H*dim_q) f32
        "wk": jnp.concatenate([w.T for w in wk_l], axis=1).astype(jnp.bfloat16),
        "bk": jnp.concatenate(bk_l)[None, :],
        "wv": jnp.concatenate([w.T for w in wv_l], axis=1).astype(jnp.bfloat16),
        "bv": jnp.concatenate(bv_l)[None, :],
        "wo": w_out.T.astype(jnp.bfloat16),                             # (H*dim_k, dim_in)
        "bo": b_out[None, :],                                           # (1, dim_in) f32
        # PyTorch-layout f32 copies for the pure-JAX reference.
        "wq_heads": jnp.stack(wq_l), "bq_heads": jnp.stack(bq_l),
        "wk_heads": jnp.stack(wk_l), "bk_heads": jnp.stack(bk_l),
        "wv_heads": jnp.stack(wv_l), "bv_heads": jnp.stack(bv_l),
        "w_out": w_out, "b_out": b_out,
    }
    return params


def reference_mha(query, key, value, params):
    """Pure-JAX f32 reference matching the PyTorch MultiHeadAttention module."""
    outs = []
    H = params["wq_heads"].shape[0]
    for h in range(H):
        q = query @ params["wq_heads"][h].T + params["bq_heads"][h]
        k = key   @ params["wk_heads"][h].T + params["bk_heads"][h]
        v = value @ params["wv_heads"][h].T + params["bv_heads"][h]
        scores = jnp.einsum("bqd,bkd->bqk", q, k) / (q.shape[-1] ** 0.5)
        probs = jax.nn.softmax(scores, axis=-1)
        outs.append(jnp.einsum("bqk,bkd->bqd", probs, v))
    cat = jnp.concatenate(outs, axis=-1)
    return cat @ params["w_out"].T + params["b_out"]


if __name__ == "__main__":
    B, S, dim_in = 2, 8, 32
    num_heads, dim_q, dim_k = 4, 16, 16

    root = jax.random.PRNGKey(0)
    kq, kk, kv, kp = jax.random.split(root, 4)
    query = jax.random.normal(kq, (B, S, dim_in), jnp.float32)
    key   = jax.random.normal(kk, (B, S, dim_in), jnp.float32)
    value = jax.random.normal(kv, (B, S, dim_in), jnp.float32)

    params = init_params(kp, num_heads, dim_in, dim_q, dim_k)

    out = multi_head_attention(query, key, value, params,
                               num_heads=num_heads, dim_q=dim_q, dim_k=dim_k)
    out = jax.block_until_ready(out)

    ref = reference_mha(query, key, value, params)
    assert out.shape == (B, S, dim_in)
    # Tolerance relaxed vs f32-exact: bf16 matmul operands + EUP approx reciprocal.
    assert jnp.allclose(out, ref, atol=3e-2, rtol=3e-2), "mismatch vs reference"

    print("KERNEL_OK")
</pallas_src>

<mosaic_0001>
module attributes {stable_mosaic.version = 11 : i64} {
  func.func @_mha_kernel(%arg0: i32, %arg1: memref<2x8x32xf32, #tpu.memory_space<vmem>>, %arg2: memref<2x8x32xf32, #tpu.memory_space<vmem>>, %arg3: memref<2x8x32xf32, #tpu.memory_space<vmem>>, %arg4: memref<32x64xbf16, #tpu.memory_space<vmem>>, %arg5: memref<1x64xf32, #tpu.memory_space<vmem>>, %arg6: memref<32x64xbf16, #tpu.memory_space<vmem>>, %arg7: memref<1x64xf32, #tpu.memory_space<vmem>>, %arg8: memref<32x64xbf16, #tpu.memory_space<vmem>>, %arg9: memref<1x64xf32, #tpu.memory_space<vmem>>, %arg10: memref<64x32xbf16, #tpu.memory_space<vmem>>, %arg11: memref<1x32xf32, #tpu.memory_space<vmem>>, %arg12: memref<2x8x32xf32, #tpu.memory_space<vmem>>, %arg13: memref<2x8x64xf32, #tpu.memory_space<vmem>>) attributes {dimension_semantics = [#tpu.dimension_semantics<parallel>], iteration_bounds = array<i64: 1>, scalar_prefetch = 0 : i64, scratch_operands = 1 : i64, tpu.core_type = #tpu.core_type<tc>, window_params = [{transform_indices = @transform_0, window_bounds = array<i64: 2, 8, 32>}, {transform_indices = @transform_1, window_bounds = array<i64: 2, 8, 32>}, {transform_indices = @transform_2, window_bounds = array<i64: 2, 8, 32>}, {pipeline_mode = #tpu.pipeline_mode<synchronous>, transform_indices = @transform_3, window_bounds = array<i64: 32, 64>}, {pipeline_mode = #tpu.pipeline_mode<synchronous>, transform_indices = @transform_4, window_bounds = array<i64: 1, 64>}, {pipeline_mode = #tpu.pipeline_mode<synchronous>, transform_indices = @transform_5, window_bounds = array<i64: 32, 64>}, {pipeline_mode = #tpu.pipeline_mode<synchronous>, transform_indices = @transform_6, window_bounds = array<i64: 1, 64>}, {pipeline_mode = #tpu.pipeline_mode<synchronous>, transform_indices = @transform_7, window_bounds = array<i64: 32, 64>}, {pipeline_mode = #tpu.pipeline_mode<synchronous>, transform_indices = @transform_8, window_bounds = array<i64: 1, 64>}, {pipeline_mode = #tpu.pipeline_mode<synchronous>, transform_indices = @transform_9, window_bounds = array<i64: 64, 32>}, {pipeline_mode = #tpu.pipeline_mode<synchronous>, transform_indices = @transform_10, window_bounds = array<i64: 1, 32>}, {transform_indices = @transform_11, window_bounds = array<i64: 2, 8, 32>}]} {
    %c0 = arith.constant 0 : index
    %c0_0 = arith.constant 0 : index
    %c0_1 = arith.constant 0 : index
    %0 = vector.load %arg1[%c0, %c0_0, %c0_1] : memref<2x8x32xf32, #tpu.memory_space<vmem>>, vector<2x8x32xf32>
    %1 = vector.shape_cast %0 : vector<2x8x32xf32> to vector<16x32xf32>
    %2 = arith.truncf %1 : vector<16x32xf32> to vector<16x32xbf16>
    %c0_2 = arith.constant 0 : index
    %c0_3 = arith.constant 0 : index
    %c0_4 = arith.constant 0 : index
    %3 = vector.load %arg2[%c0_2, %c0_3, %c0_4] : memref<2x8x32xf32, #tpu.memory_space<vmem>>, vector<2x8x32xf32>
    %4 = vector.shape_cast %3 : vector<2x8x32xf32> to vector<16x32xf32>
    %5 = arith.truncf %4 : vector<16x32xf32> to vector<16x32xbf16>
    %c0_5 = arith.constant 0 : index
    %c0_6 = arith.constant 0 : index
    %c0_7 = arith.constant 0 : index
    %6 = vector.load %arg3[%c0_5, %c0_6, %c0_7] : memref<2x8x32xf32, #tpu.memory_space<vmem>>, vector<2x8x32xf32>
    %7 = vector.shape_cast %6 : vector<2x8x32xf32> to vector<16x32xf32>
    %8 = arith.truncf %7 : vector<16x32xf32> to vector<16x32xbf16>
    %c0_8 = arith.constant 0 : index
    %c0_9 = arith.constant 0 : index
    %9 = vector.load %arg4[%c0_8, %c0_9] : memref<32x64xbf16, #tpu.memory_space<vmem>>, vector<32x64xbf16>
    %cst = arith.constant dense<0.000000e+00> : vector<16x64xf32>
    %10 = tpu.matmul %2, %9, %cst {dimension_numbers = #tpu.dot_dimension_numbers<[1], [0], [0], [1], [0, 0, 1, 1], [], []>} : vector<16x32xbf16>, vector<32x64xbf16>, vector<16x64xf32> -> vector<16x64xf32>
    %c0_10 = arith.constant 0 : index
    %c0_11 = arith.constant 0 : index
    %11 = vector.load %arg5[%c0_10, %c0_11] : memref<1x64xf32, #tpu.memory_space<vmem>>, vector<1x64xf32>
    %12 = vector.broadcast %11 : vector<1x64xf32> to vector<16x64xf32>
    %13 = arith.addf %10, %12 : vector<16x64xf32>
    %14 = vector.shape_cast %13 : vector<16x64xf32> to vector<2x8x64xf32>
    %c0_12 = arith.constant 0 : index
    %c0_13 = arith.constant 0 : index
    %15 = vector.load %arg6[%c0_12, %c0_13] : memref<32x64xbf16, #tpu.memory_space<vmem>>, vector<32x64xbf16>
    %cst_14 = arith.constant dense<0.000000e+00> : vector<16x64xf32>
    %16 = tpu.matmul %5, %15, %cst_14 {dimension_numbers = #tpu.dot_dimension_numbers<[1], [0], [0], [1], [0, 0, 1, 1], [], []>} : vector<16x32xbf16>, vector<32x64xbf16>, vector<16x64xf32> -> vector<16x64xf32>
    %c0_15 = arith.constant 0 : index
    %c0_16 = arith.constant 0 : index
    %17 = vector.load %arg7[%c0_15, %c0_16] : memref<1x64xf32, #tpu.memory_space<vmem>>, vector<1x64xf32>
    %18 = vector.broadcast %17 : vector<1x64xf32> to vector<16x64xf32>
    %19 = arith.addf %16, %18 : vector<16x64xf32>
    %20 = vector.shape_cast %19 : vector<16x64xf32> to vector<2x8x64xf32>
    %c0_17 = arith.constant 0 : index
    %c0_18 = arith.constant 0 : index
    %21 = vector.load %arg8[%c0_17, %c0_18] : memref<32x64xbf16, #tpu.memory_space<vmem>>, vector<32x64xbf16>
    %cst_19 = arith.constant dense<0.000000e+00> : vector<16x64xf32>
    %22 = tpu.matmul %8, %21, %cst_19 {dimension_numbers = #tpu.dot_dimension_numbers<[1], [0], [0], [1], [0, 0, 1, 1], [], []>} : vector<16x32xbf16>, vector<32x64xbf16>, vector<16x64xf32> -> vector<16x64xf32>
    %c0_20 = arith.constant 0 : index
    %c0_21 = arith.constant 0 : index
    %23 = vector.load %arg9[%c0_20, %c0_21] : memref<1x64xf32, #tpu.memory_space<vmem>>, vector<1x64xf32>
    %24 = vector.broadcast %23 : vector<1x64xf32> to vector<16x64xf32>
    %25 = arith.addf %22, %24 : vector<16x64xf32>
    %26 = vector.shape_cast %25 : vector<16x64xf32> to vector<2x8x64xf32>
    %27 = vector.extract_strided_slice %14 {offsets = [0, 0, 0], sizes = [2, 8, 16], strides = [1, 1, 1]} : vector<2x8x64xf32> to vector<2x8x16xf32>
    %28 = arith.truncf %27 : vector<2x8x16xf32> to vector<2x8x16xbf16>
    %29 = vector.extract_strided_slice %20 {offsets = [0, 0, 0], sizes = [2, 8, 16], strides = [1, 1, 1]} : vector<2x8x64xf32> to vector<2x8x16xf32>
    %30 = arith.truncf %29 : vector<2x8x16xf32> to vector<2x8x16xbf16>
    %31 = vector.extract_strided_slice %26 {offsets = [0, 0, 0], sizes = [2, 8, 16], strides = [1, 1, 1]} : vector<2x8x64xf32> to vector<2x8x16xf32>
    %32 = arith.truncf %31 : vector<2x8x16xf32> to vector<2x8x16xbf16>
    "tpu.trace_start"() <{level = 10 : i32, message = "bqd,bkd->bqk"}> : () -> ()
    %cst_22 = arith.constant dense<0.000000e+00> : vector<2x8x8xf32>
    %33 = tpu.matmul %28, %30, %cst_22 {dimension_numbers = #tpu.dot_dimension_numbers<[2], [2], [1], [1], [0, 0, 0, 1, 1, 1], [0], [0]>} : vector<2x8x16xbf16>, vector<2x8x16xbf16>, vector<2x8x8xf32> -> vector<2x8x8xf32>
    "tpu.trace_stop"() : () -> ()
    %cst_23 = arith.constant dense<0xFF800000> : vector<2x8xf32>
    %34 = vector.multi_reduction <maximumf>, %33, %cst_23 [2] : vector<2x8x8xf32> to vector<2x8xf32>
    %35 = vector.shape_cast %34 : vector<2x8xf32> to vector<2x8x1xf32>
    %36 = vector.broadcast %35 : vector<2x8x1xf32> to vector<2x8x8xf32>
    %37 = arith.subf %33, %36 : vector<2x8x8xf32>
    %38 = math.exp %37 : vector<2x8x8xf32>
    %cst_24 = arith.constant dense<0.000000e+00> : vector<2x8xf32>
    %39 = vector.multi_reduction <add>, %38, %cst_24 [2] : vector<2x8x8xf32> to vector<2x8xf32>
    %40 = vector.shape_cast %39 : vector<2x8xf32> to vector<2x8x1xf32>
    %41 = arith.truncf %38 : vector<2x8x8xf32> to vector<2x8x8xbf16>
    "tpu.trace_start"() <{level = 10 : i32, message = "bqk,bkd->bqd"}> : () -> ()
    %cst_25 = arith.constant dense<0.000000e+00> : vector<2x8x16xf32>
    %42 = tpu.matmul %41, %32, %cst_25 {dimension_numbers = #tpu.dot_dimension_numbers<[2], [1], [1], [2], [0, 0, 0, 1, 1, 2], [0], [0]>} : vector<2x8x8xbf16>, vector<2x8x16xbf16>, vector<2x8x16xf32> -> vector<2x8x16xf32>
    "tpu.trace_stop"() : () -> ()
    %43 = tpu.reciprocal %40 {approx = true} : vector<2x8x1xf32> -> vector<2x8x1xf32>
    %44 = vector.broadcast %43 : vector<2x8x1xf32> to vector<2x8x16xf32>
    %45 = arith.mulf %42, %44 : vector<2x8x16xf32>
    %c0_26 = arith.constant 0 : index
    %c0_27 = arith.constant 0 : index
    %c0_28 = arith.constant 0 : index
    %46 = vector.load %arg13[%c0_26, %c0_27, %c0_28] : memref<2x8x64xf32, #tpu.memory_space<vmem>>, vector<2x8x16xf32>
    tpu.vector_store %arg13[%c0_26, %c0_27, %c0_28], %45 {strides = array<i32>} : memref<2x8x64xf32, #tpu.memory_space<vmem>>, vector<2x8x16xf32>,
    %47 = vector.extract_strided_slice %14 {offsets = [0, 0, 16], sizes = [2, 8, 16], strides = [1, 1, 1]} : vector<2x8x64xf32> to vector<2x8x16xf32>
    %48 = arith.truncf %47 : vector<2x8x16xf32> to vector<2x8x16xbf16>
    %49 = vector.extract_strided_slice %20 {offsets = [0, 0, 16], sizes = [2, 8, 16], strides = [1, 1, 1]} : vector<2x8x64xf32> to vector<2x8x16xf32>
    %50 = arith.truncf %49 : vector<2x8x16xf32> to vector<2x8x16xbf16>
    %51 = vector.extract_strided_slice %26 {offsets = [0, 0, 16], sizes = [2, 8, 16], strides = [1, 1, 1]} : vector<2x8x64xf32> to vector<2x8x16xf32>
    %52 = arith.truncf %51 : vector<2x8x16xf32> to vector<2x8x16xbf16>
    "tpu.trace_start"() <{level = 10 : i32, message = "bqd,bkd->bqk"}> : () -> ()
    %cst_29 = arith.constant dense<0.000000e+00> : vector<2x8x8xf32>
    %53 = tpu.matmul %48, %50, %cst_29 {dimension_numbers = #tpu.dot_dimension_numbers<[2], [2], [1], [1], [0, 0, 0, 1, 1, 1], [0], [0]>} : vector<2x8x16xbf16>, vector<2x8x16xbf16>, vector<2x8x8xf32> -> vector<2x8x8xf32>
    "tpu.trace_stop"() : () -> ()
    %cst_30 = arith.constant dense<0xFF800000> : vector<2x8xf32>
    %54 = vector.multi_reduction <maximumf>, %53, %cst_30 [2] : vector<2x8x8xf32> to vector<2x8xf32>
    %55 = vector.shape_cast %54 : vector<2x8xf32> to vector<2x8x1xf32>
    %56 = vector.broadcast %55 : vector<2x8x1xf32> to vector<2x8x8xf32>
    %57 = arith.subf %53, %56 : vector<2x8x8xf32>
    %58 = math.exp %57 : vector<2x8x8xf32>
    %cst_31 = arith.constant dense<0.000000e+00> : vector<2x8xf32>
    %59 = vector.multi_reduction <add>, %58, %cst_31 [2] : vector<2x8x8xf32> to vector<2x8xf32>
    %60 = vector.shape_cast %59 : vector<2x8xf32> to vector<2x8x1xf32>
    %61 = arith.truncf %58 : vector<2x8x8xf32> to vector<2x8x8xbf16>
    "tpu.trace_start"() <{level = 10 : i32, message = "bqk,bkd->bqd"}> : () -> ()
    %cst_32 = arith.constant dense<0.000000e+00> : vector<2x8x16xf32>
    %62 = tpu.matmul %61, %52, %cst_32 {dimension_numbers = #tpu.dot_dimension_numbers<[2], [1], [1], [2], [0, 0, 0, 1, 1, 2], [0], [0]>} : vector<2x8x8xbf16>, vector<2x8x16xbf16>, vector<2x8x16xf32> -> vector<2x8x16xf32>
    "tpu.trace_stop"() : () -> ()
    %63 = tpu.reciprocal %60 {approx = true} : vector<2x8x1xf32> -> vector<2x8x1xf32>
    %64 = vector.broadcast %63 : vector<2x8x1xf32> to vector<2x8x16xf32>
    %65 = arith.mulf %62, %64 : vector<2x8x16xf32>
    %c0_33 = arith.constant 0 : index
    %c0_34 = arith.constant 0 : index
    %c16 = arith.constant 16 : index
    %66 = vector.load %arg13[%c0_33, %c0_34, %c16] : memref<2x8x64xf32, #tpu.memory_space<vmem>>, vector<2x8x16xf32>
    tpu.vector_store %arg13[%c0_33, %c0_34, %c16], %65 {strides = array<i32>} : memref<2x8x64xf32, #tpu.memory_space<vmem>>, vector<2x8x16xf32>,
    %67 = vector.extract_strided_slice %14 {offsets = [0, 0, 32], sizes = [2, 8, 16], strides = [1, 1, 1]} : vector<2x8x64xf32> to vector<2x8x16xf32>
    %68 = arith.truncf %67 : vector<2x8x16xf32> to vector<2x8x16xbf16>
    %69 = vector.extract_strided_slice %20 {offsets = [0, 0, 32], sizes = [2, 8, 16], strides = [1, 1, 1]} : vector<2x8x64xf32> to vector<2x8x16xf32>
    %70 = arith.truncf %69 : vector<2x8x16xf32> to vector<2x8x16xbf16>
    %71 = vector.extract_strided_slice %26 {offsets = [0, 0, 32], sizes = [2, 8, 16], strides = [1, 1, 1]} : vector<2x8x64xf32> to vector<2x8x16xf32>
    %72 = arith.truncf %71 : vector<2x8x16xf32> to vector<2x8x16xbf16>
    "tpu.trace_start"() <{level = 10 : i32, message = "bqd,bkd->bqk"}> : () -> ()
    %cst_35 = arith.constant dense<0.000000e+00> : vector<2x8x8xf32>
    %73 = tpu.matmul %68, %70, %cst_35 {dimension_numbers = #tpu.dot_dimension_numbers<[2], [2], [1], [1], [0, 0, 0, 1, 1, 1], [0], [0]>} : vector<2x8x16xbf16>, vector<2x8x16xbf16>, vector<2x8x8xf32> -> vector<2x8x8xf32>
    "tpu.trace_stop"() : () -> ()
    %cst_36 = arith.constant dense<0xFF800000> : vector<2x8xf32>
    %74 = vector.multi_reduction <maximumf>, %73, %cst_36 [2] : vector<2x8x8xf32> to vector<2x8xf32>
    %75 = vector.shape_cast %74 : vector<2x8xf32> to vector<2x8x1xf32>
    %76 = vector.broadcast %75 : vector<2x8x1xf32> to vector<2x8x8xf32>
    %77 = arith.subf %73, %76 : vector<2x8x8xf32>
    %78 = math.exp %77 : vector<2x8x8xf32>
    %cst_37 = arith.constant dense<0.000000e+00> : vector<2x8xf32>
    %79 = vector.multi_reduction <add>, %78, %cst_37 [2] : vector<2x8x8xf32> to vector<2x8xf32>
    %80 = vector.shape_cast %79 : vector<2x8xf32> to vector<2x8x1xf32>
    %81 = arith.truncf %78 : vector<2x8x8xf32> to vector<2x8x8xbf16>
    "tpu.trace_start"() <{level = 10 : i32, message = "bqk,bkd->bqd"}> : () -> ()
    %cst_38 = arith.constant dense<0.000000e+00> : vector<2x8x16xf32>
    %82 = tpu.matmul %81, %72, %cst_38 {dimension_numbers = #tpu.dot_dimension_numbers<[2], [1], [1], [2], [0, 0, 0, 1, 1, 2], [0], [0]>} : vector<2x8x8xbf16>, vector<2x8x16xbf16>, vector<2x8x16xf32> -> vector<2x8x16xf32>
    "tpu.trace_stop"() : () -> ()
    %83 = tpu.reciprocal %80 {approx = true} : vector<2x8x1xf32> -> vector<2x8x1xf32>
    %84 = vector.broadcast %83 : vector<2x8x1xf32> to vector<2x8x16xf32>
    %85 = arith.mulf %82, %84 : vector<2x8x16xf32>
    %c0_39 = arith.constant 0 : index
    %c0_40 = arith.constant 0 : index
    %c32 = arith.constant 32 : index
    %86 = vector.load %arg13[%c0_39, %c0_40, %c32] : memref<2x8x64xf32, #tpu.memory_space<vmem>>, vector<2x8x16xf32>
    tpu.vector_store %arg13[%c0_39, %c0_40, %c32], %85 {strides = array<i32>} : memref<2x8x64xf32, #tpu.memory_space<vmem>>, vector<2x8x16xf32>,
    %87 = vector.extract_strided_slice %14 {offsets = [0, 0, 48], sizes = [2, 8, 16], strides = [1, 1, 1]} : vector<2x8x64xf32> to vector<2x8x16xf32>
    %88 = arith.truncf %87 : vector<2x8x16xf32> to vector<2x8x16xbf16>
    %89 = vector.extract_strided_slice %20 {offsets = [0, 0, 48], sizes = [2, 8, 16], strides = [1, 1, 1]} : vector<2x8x64xf32> to vector<2x8x16xf32>
    %90 = arith.truncf %89 : vector<2x8x16xf32> to vector<2x8x16xbf16>
    %91 = vector.extract_strided_slice %26 {offsets = [0, 0, 48], sizes = [2, 8, 16], strides = [1, 1, 1]} : vector<2x8x64xf32> to vector<2x8x16xf32>
    %92 = arith.truncf %91 : vector<2x8x16xf32> to vector<2x8x16xbf16>
    "tpu.trace_start"() <{level = 10 : i32, message = "bqd,bkd->bqk"}> : () -> ()
    %cst_41 = arith.constant dense<0.000000e+00> : vector<2x8x8xf32>
    %93 = tpu.matmul %88, %90, %cst_41 {dimension_numbers = #tpu.dot_dimension_numbers<[2], [2], [1], [1], [0, 0, 0, 1, 1, 1], [0], [0]>} : vector<2x8x16xbf16>, vector<2x8x16xbf16>, vector<2x8x8xf32> -> vector<2x8x8xf32>
    "tpu.trace_stop"() : () -> ()
    %cst_42 = arith.constant dense<0xFF800000> : vector<2x8xf32>
    %94 = vector.multi_reduction <maximumf>, %93, %cst_42 [2] : vector<2x8x8xf32> to vector<2x8xf32>
    %95 = vector.shape_cast %94 : vector<2x8xf32> to vector<2x8x1xf32>
    %96 = vector.broadcast %95 : vector<2x8x1xf32> to vector<2x8x8xf32>
    %97 = arith.subf %93, %96 : vector<2x8x8xf32>
    %98 = math.exp %97 : vector<2x8x8xf32>
    %cst_43 = arith.constant dense<0.000000e+00> : vector<2x8xf32>
    %99 = vector.multi_reduction <add>, %98, %cst_43 [2] : vector<2x8x8xf32> to vector<2x8xf32>
    %100 = vector.shape_cast %99 : vector<2x8xf32> to vector<2x8x1xf32>
    %101 = arith.truncf %98 : vector<2x8x8xf32> to vector<2x8x8xbf16>
    "tpu.trace_start"() <{level = 10 : i32, message = "bqk,bkd->bqd"}> : () -> ()
    %cst_44 = arith.constant dense<0.000000e+00> : vector<2x8x16xf32>
    %102 = tpu.matmul %101, %92, %cst_44 {dimension_numbers = #tpu.dot_dimension_numbers<[2], [1], [1], [2], [0, 0, 0, 1, 1, 2], [0], [0]>} : vector<2x8x8xbf16>, vector<2x8x16xbf16>, vector<2x8x16xf32> -> vector<2x8x16xf32>
    "tpu.trace_stop"() : () -> ()
    %103 = tpu.reciprocal %100 {approx = true} : vector<2x8x1xf32> -> vector<2x8x1xf32>
    %104 = vector.broadcast %103 : vector<2x8x1xf32> to vector<2x8x16xf32>
    %105 = arith.mulf %102, %104 : vector<2x8x16xf32>
    %c0_45 = arith.constant 0 : index
    %c0_46 = arith.constant 0 : index
    %c48 = arith.constant 48 : index
    %106 = vector.load %arg13[%c0_45, %c0_46, %c48] : memref<2x8x64xf32, #tpu.memory_space<vmem>>, vector<2x8x16xf32>
    tpu.vector_store %arg13[%c0_45, %c0_46, %c48], %105 {strides = array<i32>} : memref<2x8x64xf32, #tpu.memory_space<vmem>>, vector<2x8x16xf32>,
    %c0_47 = arith.constant 0 : index
    %c0_48 = arith.constant 0 : index
    %c0_49 = arith.constant 0 : index
    %107 = vector.load %arg13[%c0_47, %c0_48, %c0_49] : memref<2x8x64xf32, #tpu.memory_space<vmem>>, vector<2x8x64xf32>
    %108 = vector.shape_cast %107 : vector<2x8x64xf32> to vector<16x64xf32>
    %109 = arith.truncf %108 : vector<16x64xf32> to vector<16x64xbf16>
    %c0_50 = arith.constant 0 : index
    %c0_51 = arith.constant 0 : index
    %110 = vector.load %arg10[%c0_50, %c0_51] : memref<64x32xbf16, #tpu.memory_space<vmem>>, vector<64x32xbf16>
    %cst_52 = arith.constant dense<0.000000e+00> : vector<16x32xf32>
    %111 = tpu.matmul %109, %110, %cst_52 {dimension_numbers = #tpu.dot_dimension_numbers<[1], [0], [0], [1], [0, 0, 1, 1], [], []>} : vector<16x64xbf16>, vector<64x32xbf16>, vector<16x32xf32> -> vector<16x32xf32>
    %c0_53 = arith.constant 0 : index
    %c0_54 = arith.constant 0 : index
    %112 = vector.load %arg11[%c0_53, %c0_54] : memref<1x32xf32, #tpu.memory_space<vmem>>, vector<1x32xf32>
    %113 = vector.broadcast %112 : vector<1x32xf32> to vector<16x32xf32>
    %114 = arith.addf %111, %113 : vector<16x32xf32>
    %115 = vector.shape_cast %114 : vector<16x32xf32> to vector<2x8x32xf32>
    %c0_55 = arith.constant 0 : index
    %c0_56 = arith.constant 0 : index
    %c0_57 = arith.constant 0 : index
    %116 = vector.load %arg12[%c0_55, %c0_56, %c0_57] : memref<2x8x32xf32, #tpu.memory_space<vmem>>, vector<2x8x32xf32>
    tpu.vector_store %arg12[%c0_55, %c0_56, %c0_57], %115 {strides = array<i32>} : memref<2x8x32xf32, #tpu.memory_space<vmem>>, vector<2x8x32xf32>,
    return
  }
  func.func @transform_0(%arg0: i32) -> (i32, i32, i32) {
    %c0_i32 = arith.constant 0 : i32
    %c0_i32_0 = arith.constant 0 : i32
    %c0_i32_1 = arith.constant 0 : i32
    return %arg0, %c0_i32, %c0_i32_0 : i32, i32, i32
  }
  func.func @transform_1(%arg0: i32) -> (i32, i32, i32) {
    %c0_i32 = arith.constant 0 : i32
    %c0_i32_0 = arith.constant 0 : i32
    %c0_i32_1 = arith.constant 0 : i32
    return %arg0, %c0_i32, %c0_i32_0 : i32, i32, i32
  }
  func.func @transform_2(%arg0: i32) -> (i32, i32, i32) {
    %c0_i32 = arith.constant 0 : i32
    %c0_i32_0 = arith.constant 0 : i32
    %c0_i32_1 = arith.constant 0 : i32
    return %arg0, %c0_i32, %c0_i32_0 : i32, i32, i32
  }
  func.func @transform_3(%arg0: i32) -> (i32, i32) {
    %c0_i32 = arith.constant 0 : i32
    %c0_i32_0 = arith.constant 0 : i32
    %c0_i32_1 = arith.constant 0 : i32
    return %c0_i32, %c0_i32_0 : i32, i32
  }
  func.func @transform_4(%arg0: i32) -> (i32, i32) {
    %c0_i32 = arith.constant 0 : i32
    %c0_i32_0 = arith.constant 0 : i32
    %c0_i32_1 = arith.constant 0 : i32
    return %c0_i32, %c0_i32_0 : i32, i32
  }
  func.func @transform_5(%arg0: i32) -> (i32, i32) {
    %c0_i32 = arith.constant 0 : i32
    %c0_i32_0 = arith.constant 0 : i32
    %c0_i32_1 = arith.constant 0 : i32
    return %c0_i32, %c0_i32_0 : i32, i32
  }
  func.func @transform_6(%arg0: i32) -> (i32, i32) {
    %c0_i32 = arith.constant 0 : i32
    %c0_i32_0 = arith.constant 0 : i32
    %c0_i32_1 = arith.constant 0 : i32
    return %c0_i32, %c0_i32_0 : i32, i32
  }
  func.func @transform_7(%arg0: i32) -> (i32, i32) {
    %c0_i32 = arith.constant 0 : i32
    %c0_i32_0 = arith.constant 0 : i32
    %c0_i32_1 = arith.constant 0 : i32
    return %c0_i32, %c0_i32_0 : i32, i32
  }
  func.func @transform_8(%arg0: i32) -> (i32, i32) {
    %c0_i32 = arith.constant 0 : i32
    %c0_i32_0 = arith.constant 0 : i32
    %c0_i32_1 = arith.constant 0 : i32
    return %c0_i32, %c0_i32_0 : i32, i32
  }
  func.func @transform_9(%arg0: i32) -> (i32, i32) {
    %c0_i32 = arith.constant 0 : i32
    %c0_i32_0 = arith.constant 0 : i32
    %c0_i32_1 = arith.constant 0 : i32
    return %c0_i32, %c0_i32_0 : i32, i32
  }
  func.func @transform_10(%arg0: i32) -> (i32, i32) {
    %c0_i32 = arith.constant 0 : i32
    %c0_i32_0 = arith.constant 0 : i32
    %c0_i32_1 = arith.constant 0 : i32
    return %c0_i32, %c0_i32_0 : i32, i32
  }
  func.func @transform_11(%arg0: i32) -> (i32, i32, i32) {
    %c0_i32 = arith.constant 0 : i32
    %c0_i32_0 = arith.constant 0 : i32
    %c0_i32_1 = arith.constant 0 : i32
    return %arg0, %c0_i32, %c0_i32_0 : i32, i32, i32
  }
}

</mosaic_0001>

<llo_original>
// kernel: tpu_custom_call.1
$region0: #{tpu_custom_call.1}
  #allocation0 [shape = 'u32[]', space=smem, size = 0x4, offset = 0x4, fixed_abs, tag = 'smem constant byte address 0x4 - core index']
  #allocation1 [shape = 'u32[144,128]{1,0:T(1,128)}', space=vmem, size = 0x12000, scoped, tag = 'internal scratch']
  #allocation2 [shape = 'f32[2,8,64]{2,1,0:T(8,128)}', space=vmem, size = 0x2000, scoped, tag = 'scratch operand']
  %s0 = inlined_call_operand.vmem [shape: f32[2,8,32], index: 0, kind: input, shape index: {}]
  %s1 = inlined_call_operand.vmem [shape: f32[2,8,32], index: 1, kind: input, shape index: {}]
  %s2 = inlined_call_operand.vmem [shape: f32[2,8,32], index: 2, kind: input, shape index: {}]
  %s3 = inlined_call_operand.hbm [shape: bf16[32,64], index: 3, kind: input, shape index: {}]
  %s4 = inlined_call_operand.vmem [shape: f32[1,64], index: 4, kind: input, shape index: {}]
  %s5 = inlined_call_operand.hbm [shape: bf16[32,64], index: 5, kind: input, shape index: {}]
  %s6 = inlined_call_operand.vmem [shape: f32[1,64], index: 6, kind: input, shape index: {}]
  %s7 = inlined_call_operand.hbm [shape: bf16[32,64], index: 7, kind: input, shape index: {}]
  %s8 = inlined_call_operand.vmem [shape: f32[1,64], index: 8, kind: input, shape index: {}]
  %s9 = inlined_call_operand.vmem [shape: bf16[64,32], index: 9, kind: input, shape index: {}]
  %s10 = inlined_call_operand.vmem [shape: f32[1,32], index: 10, kind: input, shape index: {}]
  %s11 = inlined_call_operand.hbm [shape: f32[2,8,32], index: 11, kind: output, shape index: {}]
  %s12 = sld [smem:[#allocation0]]
  $region66: #{tpu_custom_call.1} parent=0
    _
  %s14 = ssub.s32 1, %s12
  %s15 = scalar_select 0, %s14, %s12
  $region1: #{tpu_custom_call.1} parent=0
    #allocation3 [shape = 'u8[8192]{0}', space=vmem, size = 0x2000, scoped, tag = 'input window, operand 3, single buffered']
    #allocation4 [shape = 's32[1]{0}', space=sflag, size = 0x4, scoped, tag = 'scoped memory for tpu_custom_call.1']
    #allocation5 [shape = 's32[1]{0}', space=sflag, size = 0x4, scoped, tag = 'scoped memory for tpu_custom_call.1']
    #allocation6 [shape = 'u8[8192]{0}', space=vmem, size = 0x2000, scoped, tag = 'input window, operand 5, single buffered']
    #allocation7 [shape = 's32[1]{0}', space=sflag, size = 0x4, scoped, tag = 'scoped memory for tpu_custom_call.1']
    #allocation8 [shape = 'u8[8192]{0}', space=vmem, size = 0x2000, scoped, tag = 'input window, operand 7, single buffered']
    #allocation9 [shape = 'u8[8192]{0}', space=vmem, size = 0x2000, scoped, tag = 'output window, operand 0, single buffered']
    %16 = vsyncpa [#allocation4], 0
    %17 = vsyncpa [#allocation7], 0
    %18 = vsyncpa [#allocation5], 0
    // Predicated region
    $region2: #{tpu_custom_call.1} parent=1 // pred_check
      _
    $region3: #{tpu_custom_call.1} parent=1 // pred_check_branch
      %20 = sbr.rel (0) target = $region5
    $region4: #{tpu_custom_call.1} parent=1 // pred_region
      _
    $region5: #{tpu_custom_call.1} parent=1 // pred_fallthru
      _
    // Predicated region
    $region6: #{tpu_custom_call.1} parent=1 // pred_check
      _
    $region7: #{tpu_custom_call.1} parent=1 // pred_check_branch
      %22 = sbr.rel (0) target = $region9
    $region8: #{tpu_custom_call.1} parent=1 // pred_region
      _
    $region9: #{tpu_custom_call.1} parent=1 // pred_fallthru
      _
    // Predicated region
    $region10: #{tpu_custom_call.1} parent=1 // pred_check
      _
    $region11: #{tpu_custom_call.1} parent=1 // pred_check_branch
      %24 = sbr.rel (0) target = $region13
    $region12: #{tpu_custom_call.1} parent=1 // pred_region
      _
    $region13: #{tpu_custom_call.1} parent=1 // pred_fallthru
      _
    // Predicated region
    $region14: #{tpu_custom_call.1} parent=1 // pred_check
      _
    $region15: #{tpu_custom_call.1} parent=1 // pred_check_branch
      %26 = sbr.rel (0) target = $region17
    $region16: #{tpu_custom_call.1} parent=1 // pred_region
      %s28 = ssub.s32 256, 256
      %29 = vsyncadd [#allocation4], %s28
      %s30 = sshll.u32 [#allocation3], 4
      %s31 = int_to_ptr.vmem [resolvable:$true] %s30
      %36 = dma.hbm_to_vmem [thread:$0]  %s3, 256, %s31, [#allocation4], 64, 64, 4
    $region17: #{tpu_custom_call.1} parent=1 // pred_fallthru
      _
    // Predicated region
    $region18: #{tpu_custom_call.1} parent=1 // pred_check
      _
    $region19: #{tpu_custom_call.1} parent=1 // pred_check_branch
      %38 = sbr.rel (0) target = $region21
    $region20: #{tpu_custom_call.1} parent=1 // pred_region
      _
    $region21: #{tpu_custom_call.1} parent=1 // pred_fallthru
      _
    // Predicated region
    $region22: #{tpu_custom_call.1} parent=1 // pred_check
      _
    $region23: #{tpu_custom_call.1} parent=1 // pred_check_branch
      %40 = sbr.rel (0) target = $region25
    $region24: #{tpu_custom_call.1} parent=1 // pred_region
      %s42 = ssub.s32 256, 256
      %43 = vsyncadd [#allocation7], %s42
      %s44 = sshll.u32 [#allocation6], 4
      %s45 = int_to_ptr.vmem [resolvable:$true] %s44
      %50 = dma.hbm_to_vmem [thread:$0]  %s5, 256, %s45, [#allocation7], 64, 64, 4
    $region25: #{tpu_custom_call.1} parent=1 // pred_fallthru
      _
    // Predicated region
    $region26: #{tpu_custom_call.1} parent=1 // pred_check
      _
    $region27: #{tpu_custom_call.1} parent=1 // pred_check_branch
      %52 = sbr.rel (0) target = $region29
    $region28: #{tpu_custom_call.1} parent=1 // pred_region
      _
    $region29: #{tpu_custom_call.1} parent=1 // pred_fallthru
      _
    // Predicated region
    $region30: #{tpu_custom_call.1} parent=1 // pred_check
      _
    $region31: #{tpu_custom_call.1} parent=1 // pred_check_branch
      %54 = sbr.rel (0) target = $region33
    $region32: #{tpu_custom_call.1} parent=1 // pred_region
      %s56 = ssub.s32 256, 256
      %57 = vsyncadd [#allocation7], %s56
      %s58 = sshll.u32 [#allocation8], 4
      %s59 = int_to_ptr.vmem [resolvable:$true] %s58
      %64 = dma.hbm_to_vmem [thread:$0]  %s7, 256, %s59, [#allocation7], 64, 64, 4
    $region33: #{tpu_custom_call.1} parent=1 // pred_fallthru
      _
    // Predicated region
    $region34: #{tpu_custom_call.1} parent=1 // pred_check
      _
    $region35: #{tpu_custom_call.1} parent=1 // pred_check_branch
      %66 = sbr.rel (0) target = $region37
    $region36: #{tpu_custom_call.1} parent=1 // pred_region
      _
    $region37: #{tpu_custom_call.1} parent=1 // pred_fallthru
      _
    // Predicated region
    $region38: #{tpu_custom_call.1} parent=1 // pred_check
      _
    $region39: #{tpu_custom_call.1} parent=1 // pred_check_branch
      %68 = sbr.rel (0) target = $region41
    $region40: #{tpu_custom_call.1} parent=1 // pred_region
      _
    $region41: #{tpu_custom_call.1} parent=1 // pred_fallthru
      _
    // Predicated region
    $region42: #{tpu_custom_call.1} parent=1 // pred_check
      _
    $region43: #{tpu_custom_call.1} parent=1 // pred_check_branch
      %70 = sbr.rel (0) target = $region45
    $region44: #{tpu_custom_call.1} parent=1 // pred_region
      _
    $region45: #{tpu_custom_call.1} parent=1 // pred_fallthru
      _
    // Predicated region
    $region46: #{tpu_custom_call.1} parent=1 // pred_check
      _
    $region47: #{tpu_custom_call.1} parent=1 // pred_check_branch
      %72 = sbr.rel (0) target = $region49
    $region48: #{tpu_custom_call.1} parent=1 // pred_region
      %73 = dma.done [#allocation4], 256
    $region49: #{tpu_custom_call.1} parent=1 // pred_fallthru
      _
    // Predicated region
    $region50: #{tpu_custom_call.1} parent=1 // pred_check
      _
    $region51: #{tpu_custom_call.1} parent=1 // pred_check_branch
      %75 = sbr.rel (0) target = $region53
    $region52: #{tpu_custom_call.1} parent=1 // pred_region
      %76 = dma.done [#allocation7], 256
    $region53: #{tpu_custom_call.1} parent=1 // pred_fallthru
      _
    // Predicated region
    $region54: #{tpu_custom_call.1} parent=1 // pred_check
      _
    $region55: #{tpu_custom_call.1} parent=1 // pred_check_branch
      %78 = sbr.rel (0) target = $region57
    $region56: #{tpu_custom_call.1} parent=1 // pred_region
      %79 = dma.done [#allocation7], 256
    $region57: #{tpu_custom_call.1} parent=1 // pred_fallthru
      _
    %v81 = vld [vmem:[%s0] sm:$0xff]
    %v82 = vld [vmem:[%s0 + $0x8] sm:$0xff]
    %v83 = vpack.c.bf16 %v82, %v81
    %v84 = vld [vmem:[%s1] sm:$0xff]
    %v85 = vld [vmem:[%s1 + $0x8] sm:$0xff]
    %v86 = vpack.c.bf16 %v85, %v84
    %v87 = vld [vmem:[%s2] sm:$0xff]
    %v88 = vld [vmem:[%s2 + $0x8] sm:$0xff]
    %v89 = vpack.c.bf16 %v88, %v87
    %v90 = vld [vmem:[#allocation3] sm:$0xf]
    %v91 = vld [vmem:[#allocation3 + $0x4] sm:$0xf]
    %v92 = vld [vmem:[#allocation3 + $0x8] sm:$0xf]
    %v93 = vld [vmem:[#allocation3 + $0xc] sm:$0xf]
    %v94 = vld [vmem:[%s4] sm:$0x1]
    %v96 = vlaneseq
    %v97 = vshrl.u32 %v96, 7
    %v98 = vsub.s32 0, %v97
    %v99 = vrot.slane %v94, %v98
    %v105 = vunpack.c.l.b16 %v90
    %v106 = vunpack.c.l.b16 %v91
    %v107 = vunpack.c.l.b16 %v92
    %v108 = vunpack.c.l.b16 %v93
    %v109 = vpack.c.b16 %v106, %v105
    %v110 = vpack.c.b16 %v108, %v107
    %vm113 = vcmask 261120
    %v115 = vsel %vm113, %v83, 0
    %117 = vmatprep.subr.bf16.mxu0 0
    %118 = vmatpush1.bf16.msra.mxu0 %v109
    %119 = vmatprep.subr.bf16.mxu0 0
    %120 = vmatpush1.bf16.msra.mxu0 %v110
    %121 = vmatprep.subr.bf16.mxu0 0
    %122 = vmatpush1.bf16.msra.mxu0 0
    %123 = vmatprep.subr.bf16.mxu0 0
    %124 = vmatpush1.bf16.msra.mxu0 0
    %125 = vmatprep.subr.bf16.mxu0 0
    %126 = vmatpush1.bf16.msra.mxu0 0
    %127 = vmatprep.subr.bf16.mxu0 0
    %128 = vmatpush1.bf16.msra.mxu0 0
    %129 = vmatprep.subr.bf16.mxu0 0
    %130 = vmatpush1.bf16.msra.mxu0 0
    %131 = vmatprep.subr.bf16.mxu0 0
    %132 = vmatpush1.bf16.msra.mxu0 0
    %133 = vmatprep.subr.bf16.mxu0 0
    %134 = vmatpush1.bf16.msra.mxu0 0
    %135 = vmatprep.subr.bf16.mxu0 0
    %136 = vmatpush1.bf16.msra.mxu0 0
    %137 = vmatprep.subr.bf16.mxu0 0
    %138 = vmatpush1.bf16.msra.mxu0 0
    %139 = vmatprep.subr.bf16.mxu0 0
    %140 = vmatpush1.bf16.msra.mxu0 0
    %141 = vmatprep.subr.bf16.mxu0 0
    %142 = vmatpush1.bf16.msra.mxu0 0
    %143 = vmatprep.subr.bf16.mxu0 0
    %144 = vmatpush1.bf16.msra.mxu0 0
    %145 = vmatprep.subr.bf16.mxu0 0
    %146 = vmatpush1.bf16.msra.mxu0 0
    %147 = vmatprep.subr.bf16.mxu0 0
    %148 = vmatpush1.bf16.msra.mxu0 0
    %149 = vmatprep.mubr.bf16.mxu0 0
    %150 = vmatmul.mubr.bf16.gmra.mrb[0].mxu0 %v115
    %v151 = vpop.f32.mrb[0].mxu0
    %v152 = vadd.f32 %v99, %v151
    %v153 = vpop.f32.mrb[0].mxu0
    %v154 = vpop.f32.mrb[0].mxu0
    %v155 = vadd.f32 %v99, %v154
    %v156 = vpop.f32.mrb[0].mxu0
    %157 = vdwg.mxu0
    %v158 = vld [vmem:[#allocation6] sm:$0xf]
    %v159 = vld [vmem:[#allocation6 + $0x4] sm:$0xf]
    %v160 = vld [vmem:[#allocation6 + $0x8] sm:$0xf]
    %v161 = vld [vmem:[#allocation6 + $0xc] sm:$0xf]
    %v162 = vld [vmem:[%s6] sm:$0x1]
    %v164 = vlaneseq
    %v165 = vshrl.u32 %v164, 7
    %v166 = vsub.s32 0, %v165
    %v167 = vrot.slane %v162, %v166
    %v173 = vunpack.c.l.b16 %v158
    %v174 = vunpack.c.l.b16 %v159
    %v175 = vunpack.c.l.b16 %v160
    %v176 = vunpack.c.l.b16 %v161
    %v177 = vpack.c.b16 %v174, %v173
    %v178 = vpack.c.b16 %v176, %v175
    %v182 = vsel %vm113, %v86, 0
    %184 = vmatprep.subr.bf16.mxu0 0
    %185 = vmatpush1.bf16.msra.mxu0 %v177
    %186 = vmatprep.subr.bf16.mxu0 0
    %187 = vmatpush1.bf16.msra.mxu0 %v178
    %188 = vmatprep.subr.bf16.mxu0 0
    %189 = vmatpush1.bf16.msra.mxu0 0
    %190 = vmatprep.subr.bf16.mxu0 0
    %191 = vmatpush1.bf16.msra.mxu0 0
    %192 = vmatprep.subr.bf16.mxu0 0
    %193 = vmatpush1.bf16.msra.mxu0 0
    %194 = vmatprep.subr.bf16.mxu0 0
    %195 = vmatpush1.bf16.msra.mxu0 0
    %196 = vmatprep.subr.bf16.mxu0 0
    %197 = vmatpush1.bf16.msra.mxu0 0
    %198 = vmatprep.subr.bf16.mxu0 0
    %199 = vmatpush1.bf16.msra.mxu0 0
    %200 = vmatprep.subr.bf16.mxu0 0
    %201 = vmatpush1.bf16.msra.mxu0 0
    %202 = vmatprep.subr.bf16.mxu0 0
    %203 = vmatpush1.bf16.msra.mxu0 0
    %204 = vmatprep.subr.bf16.mxu0 0
    %205 = vmatpush1.bf16.msra.mxu0 0
    %206 = vmatprep.subr.bf16.mxu0 0
    %207 = vmatpush1.bf16.msra.mxu0 0
    %208 = vmatprep.subr.bf16.mxu0 0
    %209 = vmatpush1.bf16.msra.mxu0 0
    %210 = vmatprep.subr.bf16.mxu0 0
    %211 = vmatpush1.bf16.msra.mxu0 0
    %212 = vmatprep.subr.bf16.mxu0 0
    %213 = vmatpush1.bf16.msra.mxu0 0
    %214 = vmatprep.subr.bf16.mxu0 0
    %215 = vmatpush1.bf16.msra.mxu0 0
    %216 = vmatprep.mubr.bf16.mxu0 0
    %217 = vmatmul.mubr.bf16.gmra.mrb[0].mxu0 %v182
    %v218 = vpop.f32.mrb[0].mxu0
    %v219 = vadd.f32 %v167, %v218
    %v220 = vpop.f32.mrb[0].mxu0
    %v221 = vpop.f32.mrb[0].mxu0
    %v222 = vadd.f32 %v167, %v221
    %v223 = vpop.f32.mrb[0].mxu0
    %224 = vdwg.mxu0
    %v225 = vld [vmem:[#allocation8] sm:$0xf]
    %v226 = vld [vmem:[#allocation8 + $0x4] sm:$0xf]
    %v227 = vld [vmem:[#allocation8 + $0x8] sm:$0xf]
    %v228 = vld [vmem:[#allocation8 + $0xc] sm:$0xf]
    %v229 = vld [vmem:[%s8] sm:$0x1]
    %v231 = vlaneseq
    %v232 = vshrl.u32 %v231, 7
    %v233 = vsub.s32 0, %v232
    %v234 = vrot.slane %v229, %v233
    %v240 = vunpack.c.l.b16 %v225
    %v241 = vunpack.c.l.b16 %v226
    %v242 = vunpack.c.l.b16 %v227
    %v243 = vunpack.c.l.b16 %v228
    %v244 = vpack.c.b16 %v241, %v240
    %v245 = vpack.c.b16 %v243, %v242
    %v249 = vsel %vm113, %v89, 0
    %251 = vmatprep.subr.bf16.mxu0 0
    %252 = vmatpush1.bf16.msra.mxu0 %v244
    %253 = vmatprep.subr.bf16.mxu0 0
    %254 = vmatpush1.bf16.msra.mxu0 %v245
    %255 = vmatprep.subr.bf16.mxu0 0
    %256 = vmatpush1.bf16.msra.mxu0 0
    %257 = vmatprep.subr.bf16.mxu0 0
    %258 = vmatpush1.bf16.msra.mxu0 0
    %259 = vmatprep.subr.bf16.mxu0 0
    %260 = vmatpush1.bf16.msra.mxu0 0
    %261 = vmatprep.subr.bf16.mxu0 0
    %262 = vmatpush1.bf16.msra.mxu0 0
    %263 = vmatprep.subr.bf16.mxu0 0
    %264 = vmatpush1.bf16.msra.mxu0 0
    %265 = vmatprep.subr.bf16.mxu0 0
    %266 = vmatpush1.bf16.msra.mxu0 0
    %267 = vmatprep.subr.bf16.mxu0 0
    %268 = vmatpush1.bf16.msra.mxu0 0
    %269 = vmatprep.subr.bf16.mxu0 0
    %270 = vmatpush1.bf16.msra.mxu0 0
    %271 = vmatprep.subr.bf16.mxu0 0
    %272 = vmatpush1.bf16.msra.mxu0 0
    %273 = vmatprep.subr.bf16.mxu0 0
    %274 = vmatpush1.bf16.msra.mxu0 0
    %275 = vmatprep.subr.bf16.mxu0 0
    %276 = vmatpush1.bf16.msra.mxu0 0
    %277 = vmatprep.subr.bf16.mxu0 0
    %278 = vmatpush1.bf16.msra.mxu0 0
    %279 = vmatprep.subr.bf16.mxu0 0
    %280 = vmatpush1.bf16.msra.mxu0 0
    %281 = vmatprep.subr.bf16.mxu0 0
    %282 = vmatpush1.bf16.msra.mxu0 0
    %283 = vmatprep.mubr.bf16.mxu0 0
    %284 = vmatmul.mubr.bf16.gmra.mrb[0].mxu0 %v249
    %v285 = vpop.f32.mrb[0].mxu0
    %v286 = vadd.f32 %v234, %v285
    %v287 = vpop.f32.mrb[0].mxu0
    %v288 = vpop.f32.mrb[0].mxu0
    %v289 = vadd.f32 %v234, %v288
    %v290 = vpop.f32.mrb[0].mxu0
    %291 = vdwg.mxu0
    %v292 = vpack.c.bf16 %v152, %v152
    %v293 = vpack.c.bf16 %v155, %v155
    %v294 = vpack.c.bf16 %v219, %v219
    %v295 = vpack.c.bf16 %v222, %v222
    %v296 = vpack.c.bf16 %v286, %v286
    %v297 = vpack.c.bf16 %v289, %v289
    %vm298 = vcmask 130048
    %v300 = vsel %vm298, %v292, 0
    %v303 = vsel %vm298, %v294, 0
    %305 = vmatprep.subr.bf16.mxu0 0
    %306 = vmatpush1.bf16.xpose.msra.mxu0 %v303
    %307 = vmatprep.subr.bf16.mxu0 0
    %308 = vmatpush1.bf16.xpose.msra.mxu0 0
    %309 = vmatprep.subr.bf16.mxu0 0
    %310 = vmatpush1.bf16.xpose.msra.mxu0 0
    %311 = vmatprep.subr.bf16.mxu0 0
    %312 = vmatpush1.bf16.xpose.msra.mxu0 0
    %313 = vmatprep.subr.bf16.mxu0 0
    %314 = vmatpush1.bf16.xpose.msra.mxu0 0
    %315 = vmatprep.subr.bf16.mxu0 0
    %316 = vmatpush1.bf16.xpose.msra.mxu0 0
    %317 = vmatprep.subr.bf16.mxu0 0
    %318 = vmatpush1.bf16.xpose.msra.mxu0 0
    %319 = vmatprep.subr.bf16.mxu0 0
    %320 = vmatpush1.bf16.xpose.msra.mxu0 0
    %321 = vmatprep.subr.bf16.mxu0 0
    %322 = vmatpush1.bf16.xpose.msra.mxu0 0
    %323 = vmatprep.subr.bf16.mxu0 0
    %324 = vmatpush1.bf16.xpose.msra.mxu0 0
    %325 = vmatprep.subr.bf16.mxu0 0
    %326 = vmatpush1.bf16.xpose.msra.mxu0 0
    %327 = vmatprep.subr.bf16.mxu0 0
    %328 = vmatpush1.bf16.xpose.msra.mxu0 0
    %329 = vmatprep.subr.bf16.mxu0 0
    %330 = vmatpush1.bf16.xpose.msra.mxu0 0
    %331 = vmatprep.subr.bf16.mxu0 0
    %332 = vmatpush1.bf16.xpose.msra.mxu0 0
    %333 = vmatprep.subr.bf16.mxu0 0
    %334 = vmatpush1.bf16.xpose.msra.mxu0 0
    %335 = vmatprep.subr.bf16.mxu0 0
    %336 = vmatpush1.bf16.xpose.msra.mxu0 0
    %337 = vmatprep.mubr.bf16.mxu0 0
    %338 = vmatmul.mubr.bf16.gmra.mrb[0].mxu0 %v300
    %v339 = vpop.f32.mrb[0].mxu0
    %v340 = vadd.f32 0.0, %v339
    %v341 = vpop.f32.mrb[0].mxu0
    %v342 = vpop.f32.mrb[0].mxu0
    %v343 = vpop.f32.mrb[0].mxu0
    %344 = vdwg.mxu0
    %v346 = vsel %vm298, %v293, 0
    %v349 = vsel %vm298, %v295, 0
    %351 = vmatprep.subr.bf16.mxu0 0
    %352 = vmatpush1.bf16.xpose.msra.mxu0 %v349
    %353 = vmatprep.subr.bf16.mxu0 0
    %354 = vmatpush1.bf16.xpose.msra.mxu0 0
    %355 = vmatprep.subr.bf16.mxu0 0
    %356 = vmatpush1.bf16.xpose.msra.mxu0 0
    %357 = vmatprep.subr.bf16.mxu0 0
    %358 = vmatpush1.bf16.xpose.msra.mxu0 0
    %359 = vmatprep.subr.bf16.mxu0 0
    %360 = vmatpush1.bf16.xpose.msra.mxu0 0
    %361 = vmatprep.subr.bf16.mxu0 0
    %362 = vmatpush1.bf16.xpose.msra.mxu0 0
    %363 = vmatprep.subr.bf16.mxu0 0
    %364 = vmatpush1.bf16.xpose.msra.mxu0 0
    %365 = vmatprep.subr.bf16.mxu0 0
    %366 = vmatpush1.bf16.xpose.msra.mxu0 0
    %367 = vmatprep.subr.bf16.mxu0 0
    %368 = vmatpush1.bf16.xpose.msra.mxu0 0
    %369 = vmatprep.subr.bf16.mxu0 0
    %370 = vmatpush1.bf16.xpose.msra.mxu0 0
    %371 = vmatprep.subr.bf16.mxu0 0
    %372 = vmatpush1.bf16.xpose.msra.mxu0 0
    %373 = vmatprep.subr.bf16.mxu0 0
    %374 = vmatpush1.bf16.xpose.msra.mxu0 0
    %375 = vmatprep.subr.bf16.mxu0 0
    %376 = vmatpush1.bf16.xpose.msra.mxu0 0
    %377 = vmatprep.subr.bf16.mxu0 0
    %378 = vmatpush1.bf16.xpose.msra.mxu0 0
    %379 = vmatprep.subr.bf16.mxu0 0
    %380 = vmatpush1.bf16.xpose.msra.mxu0 0
    %381 = vmatprep.subr.bf16.mxu0 0
    %382 = vmatpush1.bf16.xpose.msra.mxu0 0
    %383 = vmatprep.mubr.bf16.mxu0 0
    %384 = vmatmul.mubr.bf16.gmra.mrb[0].mxu0 %v346
    %v385 = vpop.f32.mrb[0].mxu0
    %v386 = vadd.f32 0.0, %v385
    %v387 = vpop.f32.mrb[0].mxu0
    %v388 = vpop.f32.mrb[0].mxu0
    %v389 = vpop.f32.mrb[0].mxu0
    %390 = vdwg.mxu0
    %vm391 = vcmask 64512
    %v392 = vsel %vm391, %v340, -inf
    %393 = vmax.xlane.f32.xlu0 %v392
    %v394 = vpop.xlane.xlu0 %393
    %v395 = vsel %vm391, %v386, -inf
    %396 = vmax.xlane.f32.xlu0 %v395
    %v397 = vpop.xlane.xlu0 %396
    %v398 = vsub.f32 %v340, %v394
    %v399 = vsub.f32 %v386, %v397
    %v400 = vmul.f32 %v398, 1.442695
    %v401 = vpow.pop %v400
    %v402 = vmul.f32 %v399, 1.442695
    %v403 = vpow.pop %v402
    %v404 = vsel %vm391, %v401, 0.0
    %405 = vadd.xlane.f32.xlu0 %v404
    %v406 = vpop.xlane.xlu0 %405
    %v407 = vsel %vm391, %v403, 0.0
    %408 = vadd.xlane.f32.xlu0 %v407
    %v409 = vpop.xlane.xlu0 %408
    %v410 = vpack.c.bf16 %v401, %v401
    %v411 = vpack.c.bf16 %v403, %v403
    %v413 = vsel %vm391, %v410, 0
    %vm415 = vcmask 1043456
    %v417 = vsel %vm415, %v296, 0
    %419 = vmatprep.subr.bf16.mxu0 0
    %420 = vmatpush1.bf16.msra.mxu0 %v417
    %421 = vmatprep.subr.bf16.mxu0 0
    %422 = vmatpush1.bf16.msra.mxu0 0
    %423 = vmatprep.subr.bf16.mxu0 0
    %424 = vmatpush1.bf16.msra.mxu0 0
    %425 = vmatprep.subr.bf16.mxu0 0
    %426 = vmatpush1.bf16.msra.mxu0 0
    %427 = vmatprep.subr.bf16.mxu0 0
    %428 = vmatpush1.bf16.msra.mxu0 0
    %429 = vmatprep.subr.bf16.mxu0 0
    %430 = vmatpush1.bf16.msra.mxu0 0
    %431 = vmatprep.subr.bf16.mxu0 0
    %432 = vmatpush1.bf16.msra.mxu0 0
    %433 = vmatprep.subr.bf16.mxu0 0
    %434 = vmatpush1.bf16.msra.mxu0 0
    %435 = vmatprep.subr.bf16.mxu0 0
    %436 = vmatpush1.bf16.msra.mxu0 0
    %437 = vmatprep.subr.bf16.mxu0 0
    %438 = vmatpush1.bf16.msra.mxu0 0
    %439 = vmatprep.subr.bf16.mxu0 0
    %440 = vmatpush1.bf16.msra.mxu0 0
    %441 = vmatprep.subr.bf16.mxu0 0
    %442 = vmatpush1.bf16.msra.mxu0 0
    %443 = vmatprep.subr.bf16.mxu0 0
    %444 = vmatpush1.bf16.msra.mxu0 0
    %445 = vmatprep.subr.bf16.mxu0 0
    %446 = vmatpush1.bf16.msra.mxu0 0
    %447 = vmatprep.subr.bf16.mxu0 0
    %448 = vmatpush1.bf16.msra.mxu0 0
    %449 = vmatprep.subr.bf16.mxu0 0
    %450 = vmatpush1.bf16.msra.mxu0 0
    %451 = vmatprep.mubr.bf16.mxu0 0
    %452 = vmatmul.mubr.bf16.gmra.mrb[0].mxu0 %v413
    %v453 = vpop.f32.mrb[0].mxu0
    %v454 = vadd.f32 0.0, %v453
    %v455 = vpop.f32.mrb[0].mxu0
    %v456 = vpop.f32.mrb[0].mxu0
    %v457 = vpop.f32.mrb[0].mxu0
    %458 = vdwg.mxu0
    %v460 = vsel %vm391, %v411, 0
    %v463 = vsel %vm415, %v297, 0
    %465 = vmatprep.subr.bf16.mxu0 0
    %466 = vmatpush1.bf16.msra.mxu0 %v463
    %467 = vmatprep.subr.bf16.mxu0 0
    %468 = vmatpush1.bf16.msra.mxu0 0
    %469 = vmatprep.subr.bf16.mxu0 0
    %470 = vmatpush1.bf16.msra.mxu0 0
    %471 = vmatprep.subr.bf16.mxu0 0
    %472 = vmatpush1.bf16.msra.mxu0 0
    %473 = vmatprep.subr.bf16.mxu0 0
    %474 = vmatpush1.bf16.msra.mxu0 0
    %475 = vmatprep.subr.bf16.mxu0 0
    %476 = vmatpush1.bf16.msra.mxu0 0
    %477 = vmatprep.subr.bf16.mxu0 0
    %478 = vmatpush1.bf16.msra.mxu0 0
    %479 = vmatprep.subr.bf16.mxu0 0
    %480 = vmatpush1.bf16.msra.mxu0 0
    %481 = vmatprep.subr.bf16.mxu0 0
    %482 = vmatpush1.bf16.msra.mxu0 0
    %483 = vmatprep.subr.bf16.mxu0 0
    %484 = vmatpush1.bf16.msra.mxu0 0
    %485 = vmatprep.subr.bf16.mxu0 0
    %486 = vmatpush1.bf16.msra.mxu0 0
    %487 = vmatprep.subr.bf16.mxu0 0
    %488 = vmatpush1.bf16.msra.mxu0 0
    %489 = vmatprep.subr.bf16.mxu0 0
    %490 = vmatpush1.bf16.msra.mxu0 0
    %491 = vmatprep.subr.bf16.mxu0 0
    %492 = vmatpush1.bf16.msra.mxu0 0
    %493 = vmatprep.subr.bf16.mxu0 0
    %494 = vmatpush1.bf16.msra.mxu0 0
    %495 = vmatprep.subr.bf16.mxu0 0
    %496 = vmatpush1.bf16.msra.mxu0 0
    %497 = vmatprep.mubr.bf16.mxu0 0
    %498 = vmatmul.mubr.bf16.gmra.mrb[0].mxu0 %v460
    %v499 = vpop.f32.mrb[0].mxu0
    %v500 = vadd.f32 0.0, %v499
    %v501 = vpop.f32.mrb[0].mxu0
    %v502 = vpop.f32.mrb[0].mxu0
    %v503 = vpop.f32.mrb[0].mxu0
    %504 = vdwg.mxu0
    %v505 = vrcp.pop %v406
    %v506 = vrcp.pop %v409
    %v507 = vmul.f32 %v454, %v505
    %v508 = vmul.f32 %v500, %v506
    %509 = vst.msk [vmem:[#allocation2] sm:$0xff] %vm298, %v507
    %510 = vst.msk [vmem:[#allocation2 + $0x8] sm:$0xff] %vm298, %v508
    %512 = vrot.lane.b32.xlu0 %v292, 112
    %v513 = vpop.permute.xlu0 %512
    %515 = vrot.lane.b32.xlu0 %v294, 112
    %v516 = vpop.permute.xlu0 %515
    %v518 = vsel %vm298, %v513, 0
    %v521 = vsel %vm298, %v516, 0
    %523 = vmatprep.subr.bf16.mxu0 0
    %524 = vmatpush1.bf16.xpose.msra.mxu0 %v521
    %525 = vmatprep.subr.bf16.mxu0 0
    %526 = vmatpush1.bf16.xpose.msra.mxu0 0
    %527 = vmatprep.subr.bf16.mxu0 0
    %528 = vmatpush1.bf16.xpose.msra.mxu0 0
    %529 = vmatprep.subr.bf16.mxu0 0
    %530 = vmatpush1.bf16.xpose.msra.mxu0 0
    %531 = vmatprep.subr.bf16.mxu0 0
    %532 = vmatpush1.bf16.xpose.msra.mxu0 0
    %533 = vmatprep.subr.bf16.mxu0 0
    %534 = vmatpush1.bf16.xpose.msra.mxu0 0
    %535 = vmatprep.subr.bf16.mxu0 0
    %536 = vmatpush1.bf16.xpose.msra.mxu0 0
    %537 = vmatprep.subr.bf16.mxu0 0
    %538 = vmatpush1.bf16.xpose.msra.mxu0 0
    %539 = vmatprep.subr.bf16.mxu0 0
    %540 = vmatpush1.bf16.xpose.msra.mxu0 0
    %541 = vmatprep.subr.bf16.mxu0 0
    %542 = vmatpush1.bf16.xpose.msra.mxu0 0
    %543 = vmatprep.subr.bf16.mxu0 0
    %544 = vmatpush1.bf16.xpose.msra.mxu0 0
    %545 = vmatprep.subr.bf16.mxu0 0
    %546 = vmatpush1.bf16.xpose.msra.mxu0 0
    %547 = vmatprep.subr.bf16.mxu0 0
    %548 = vmatpush1.bf16.xpose.msra.mxu0 0
    %549 = vmatprep.subr.bf16.mxu0 0
    %550 = vmatpush1.bf16.xpose.msra.mxu0 0
    %551 = vmatprep.subr.bf16.mxu0 0
    %552 = vmatpush1.bf16.xpose.msra.mxu0 0
    %553 = vmatprep.subr.bf16.mxu0 0
    %554 = vmatpush1.bf16.xpose.msra.mxu0 0
    %555 = vmatprep.mubr.bf16.mxu0 0
    %556 = vmatmul.mubr.bf16.gmra.mrb[0].mxu0 %v518
    %v557 = vpop.f32.mrb[0].mxu0
    %v558 = vadd.f32 0.0, %v557
    %v559 = vpop.f32.mrb[0].mxu0
    %v560 = vpop.f32.mrb[0].mxu0
    %v561 = vpop.f32.mrb[0].mxu0
    %562 = vdwg.mxu0
    %564 = vrot.lane.b32.xlu0 %v293, 112
    %v565 = vpop.permute.xlu0 %564
    %567 = vrot.lane.b32.xlu0 %v295, 112
    %v568 = vpop.permute.xlu0 %567
    %v570 = vsel %vm298, %v565, 0
    %v573 = vsel %vm298, %v568, 0
    %575 = vmatprep.subr.bf16.mxu0 0
    %576 = vmatpush1.bf16.xpose.msra.mxu0 %v573
    %577 = vmatprep.subr.bf16.mxu0 0
    %578 = vmatpush1.bf16.xpose.msra.mxu0 0
    %579 = vmatprep.subr.bf16.mxu0 0
    %580 = vmatpush1.bf16.xpose.msra.mxu0 0
    %581 = vmatprep.subr.bf16.mxu0 0
    %582 = vmatpush1.bf16.xpose.msra.mxu0 0
    %583 = vmatprep.subr.bf16.mxu0 0
    %584 = vmatpush1.bf16.xpose.msra.mxu0 0
    %585 = vmatprep.subr.bf16.mxu0 0
    %586 = vmatpush1.bf16.xpose.msra.mxu0 0
    %587 = vmatprep.subr.bf16.mxu0 0
    %588 = vmatpush1.bf16.xpose.msra.mxu0 0
    %589 = vmatprep.subr.bf16.mxu0 0
    %590 = vmatpush1.bf16.xpose.msra.mxu0 0
    %591 = vmatprep.subr.bf16.mxu0 0
    %592 = vmatpush1.bf16.xpose.msra.mxu0 0
    %593 = vmatprep.subr.bf16.mxu0 0
    %594 = vmatpush1.bf16.xpose.msra.mxu0 0
    %595 = vmatprep.subr.bf16.mxu0 0
    %596 = vmatpush1.bf16.xpose.msra.mxu0 0
    %597 = vmatprep.subr.bf16.mxu0 0
    %598 = vmatpush1.bf16.xpose.msra.mxu0 0
    %599 = vmatprep.subr.bf16.mxu0 0
    %600 = vmatpush1.bf16.xpose.msra.mxu0 0
    %601 = vmatprep.subr.bf16.mxu0 0
    %602 = vmatpush1.bf16.xpose.msra.mxu0 0
    %603 = vmatprep.subr.bf16.mxu0 0
    %604 = vmatpush1.bf16.xpose.msra.mxu0 0
    %605 = vmatprep.subr.bf16.mxu0 0
    %606 = vmatpush1.bf16.xpose.msra.mxu0 0
    %607 = vmatprep.mubr.bf16.mxu0 0
    %608 = vmatmul.mubr.bf16.gmra.mrb[0].mxu0 %v570
    %v609 = vpop.f32.mrb[0].mxu0
    %v610 = vadd.f32 0.0, %v609
    %v611 = vpop.f32.mrb[0].mxu0
    %v612 = vpop.f32.mrb[0].mxu0
    %v613 = vpop.f32.mrb[0].mxu0
    %614 = vdwg.mxu0
    %v615 = vsel %vm391, %v558, -inf
    %616 = vmax.xlane.f32.xlu0 %v615
    %v617 = vpop.xlane.xlu0 %616
    %v618 = vsel %vm391, %v610, -inf
    %619 = vmax.xlane.f32.xlu0 %v618
    %v620 = vpop.xlane.xlu0 %619
    %v621 = vsub.f32 %v558, %v617
    %v622 = vsub.f32 %v610, %v620
    %v623 = vmul.f32 %v621, 1.442695
    %v624 = vpow.pop %v623
    %v625 = vmul.f32 %v622, 1.442695
    %v626 = vpow.pop %v625
    %v627 = vsel %vm391, %v624, 0.0
    %628 = vadd.xlane.f32.xlu0 %v627
    %v629 = vpop.xlane.xlu0 %628
    %v630 = vsel %vm391, %v626, 0.0
    %631 = vadd.xlane.f32.xlu0 %v630
    %v632 = vpop.xlane.xlu0 %631
    %v633 = vpack.c.bf16 %v624, %v624
    %v634 = vpack.c.bf16 %v626, %v626
    %636 = vrot.lane.b32.xlu0 %v296, 112
    %v637 = vpop.permute.xlu0 %636
    %v639 = vsel %vm391, %v633, 0
    %v642 = vsel %vm415, %v637, 0
    %644 = vmatprep.subr.bf16.mxu0 0
    %645 = vmatpush1.bf16.msra.mxu0 %v642
    %646 = vmatprep.subr.bf16.mxu0 0
    %647 = vmatpush1.bf16.msra.mxu0 0
    %648 = vmatprep.subr.bf16.mxu0 0
    %649 = vmatpush1.bf16.msra.mxu0 0
    %650 = vmatprep.subr.bf16.mxu0 0
    %651 = vmatpush1.bf16.msra.mxu0 0
    %652 = vmatprep.subr.bf16.mxu0 0
    %653 = vmatpush1.bf16.msra.mxu0 0
    %654 = vmatprep.subr.bf16.mxu0 0
    %655 = vmatpush1.bf16.msra.mxu0 0
    %656 = vmatprep.subr.bf16.mxu0 0
    %657 = vmatpush1.bf16.msra.mxu0 0
    %658 = vmatprep.subr.bf16.mxu0 0
    %659 = vmatpush1.bf16.msra.mxu0 0
    %660 = vmatprep.subr.bf16.mxu0 0
    %661 = vmatpush1.bf16.msra.mxu0 0
    %662 = vmatprep.subr.bf16.mxu0 0
    %663 = vmatpush1.bf16.msra.mxu0 0
    %664 = vmatprep.subr.bf16.mxu0 0
    %665 = vmatpush1.bf16.msra.mxu0 0
    %666 = vmatprep.subr.bf16.mxu0 0
    %667 = vmatpush1.bf16.msra.mxu0 0
    %668 = vmatprep.subr.bf16.mxu0 0
    %669 = vmatpush1.bf16.msra.mxu0 0
    %670 = vmatprep.subr.bf16.mxu0 0
    %671 = vmatpush1.bf16.msra.mxu0 0
    %672 = vmatprep.subr.bf16.mxu0 0
    %673 = vmatpush1.bf16.msra.mxu0 0
    %674 = vmatprep.subr.bf16.mxu0 0
    %675 = vmatpush1.bf16.msra.mxu0 0
    %676 = vmatprep.mubr.bf16.mxu0 0
    %677 = vmatmul.mubr.bf16.gmra.mrb[0].mxu0 %v639
    %v678 = vpop.f32.mrb[0].mxu0
    %v679 = vadd.f32 0.0, %v678
    %v680 = vpop.f32.mrb[0].mxu0
    %v681 = vpop.f32.mrb[0].mxu0
    %v682 = vpop.f32.mrb[0].mxu0
    %683 = vdwg.mxu0
    %685 = vrot.lane.b32.xlu0 %v297, 112
    %v686 = vpop.permute.xlu0 %685
    %v688 = vsel %vm391, %v634, 0
    %v691 = vsel %vm415, %v686, 0
    %693 = vmatprep.subr.bf16.mxu0 0
    %694 = vmatpush1.bf16.msra.mxu0 %v691
    %695 = vmatprep.subr.bf16.mxu0 0
    %696 = vmatpush1.bf16.msra.mxu0 0
    %697 = vmatprep.subr.bf16.mxu0 0
    %698 = vmatpush1.bf16.msra.mxu0 0
    %699 = vmatprep.subr.bf16.mxu0 0
    %700 = vmatpush1.bf16.msra.mxu0 0
    %701 = vmatprep.subr.bf16.mxu0 0
    %702 = vmatpush1.bf16.msra.mxu0 0
    %703 = vmatprep.subr.bf16.mxu0 0
    %704 = vmatpush1.bf16.msra.mxu0 0
    %705 = vmatprep.subr.bf16.mxu0 0
    %706 = vmatpush1.bf16.msra.mxu0 0
    %707 = vmatprep.subr.bf16.mxu0 0
    %708 = vmatpush1.bf16.msra.mxu0 0
    %709 = vmatprep.subr.bf16.mxu0 0
    %710 = vmatpush1.bf16.msra.mxu0 0
    %711 = vmatprep.subr.bf16.mxu0 0
    %712 = vmatpush1.bf16.msra.mxu0 0
    %713 = vmatprep.subr.bf16.mxu0 0
    %714 = vmatpush1.bf16.msra.mxu0 0
    %715 = vmatprep.subr.bf16.mxu0 0
    %716 = vmatpush1.bf16.msra.mxu0 0
    %717 = vmatprep.subr.bf16.mxu0 0
    %718 = vmatpush1.bf16.msra.mxu0 0
    %719 = vmatprep.subr.bf16.mxu0 0
    %720 = vmatpush1.bf16.msra.mxu0 0
    %721 = vmatprep.subr.bf16.mxu0 0
    %722 = vmatpush1.bf16.msra.mxu0 0
    %723 = vmatprep.subr.bf16.mxu0 0
    %724 = vmatpush1.bf16.msra.mxu0 0
    %725 = vmatprep.mubr.bf16.mxu0 0
    %726 = vmatmul.mubr.bf16.gmra.mrb[0].mxu0 %v688
    %v727 = vpop.f32.mrb[0].mxu0
    %v728 = vadd.f32 0.0, %v727
    %v729 = vpop.f32.mrb[0].mxu0
    %v730 = vpop.f32.mrb[0].mxu0
    %v731 = vpop.f32.mrb[0].mxu0
    %732 = vdwg.mxu0
    %v733 = vrcp.pop %v629
    %v734 = vrcp.pop %v632
    %v735 = vmul.f32 %v679, %v733
    %v736 = vmul.f32 %v728, %v734
    %739 = vrot.lane.b32.xlu0 %v735, 16
    %v740 = vpop.permute.xlu0 %739
    %741 = vrot.lane.b32.xlu0 %v736, 16
    %v742 = vpop.permute.xlu0 %741
    %vm745 = vcmask 261248
    %746 = vst.msk [vmem:[#allocation2] sm:$0xff] %vm745, %v740
    %747 = vst.msk [vmem:[#allocation2 + $0x8] sm:$0xff] %vm745, %v742
    %748 = vrot.lane.b32.xlu0 %v292, 96
    %v749 = vpop.permute.xlu0 %748
    %750 = vrot.lane.b32.xlu0 %v294, 96
    %v751 = vpop.permute.xlu0 %750
    %v753 = vsel %vm298, %v749, 0
    %v756 = vsel %vm298, %v751, 0
    %758 = vmatprep.subr.bf16.mxu0 0
    %759 = vmatpush1.bf16.xpose.msra.mxu0 %v756
    %760 = vmatprep.subr.bf16.mxu0 0
    %761 = vmatpush1.bf16.xpose.msra.mxu0 0
    %762 = vmatprep.subr.bf16.mxu0 0
    %763 = vmatpush1.bf16.xpose.msra.mxu0 0
    %764 = vmatprep.subr.bf16.mxu0 0
    %765 = vmatpush1.bf16.xpose.msra.mxu0 0
    %766 = vmatprep.subr.bf16.mxu0 0
    %767 = vmatpush1.bf16.xpose.msra.mxu0 0
    %768 = vmatprep.subr.bf16.mxu0 0
    %769 = vmatpush1.bf16.xpose.msra.mxu0 0
    %770 = vmatprep.subr.bf16.mxu0 0
    %771 = vmatpush1.bf16.xpose.msra.mxu0 0
    %772 = vmatprep.subr.bf16.mxu0 0
    %773 = vmatpush1.bf16.xpose.msra.mxu0 0
    %774 = vmatprep.subr.bf16.mxu0 0
    %775 = vmatpush1.bf16.xpose.msra.mxu0 0
    %776 = vmatprep.subr.bf16.mxu0 0
    %777 = vmatpush1.bf16.xpose.msra.mxu0 0
    %778 = vmatprep.subr.bf16.mxu0 0
    %779 = vmatpush1.bf16.xpose.msra.mxu0 0
    %780 = vmatprep.subr.bf16.mxu0 0
    %781 = vmatpush1.bf16.xpose.msra.mxu0 0
    %782 = vmatprep.subr.bf16.mxu0 0
    %783 = vmatpush1.bf16.xpose.msra.mxu0 0
    %784 = vmatprep.subr.bf16.mxu0 0
    %785 = vmatpush1.bf16.xpose.msra.mxu0 0
    %786 = vmatprep.subr.bf16.mxu0 0
    %787 = vmatpush1.bf16.xpose.msra.mxu0 0
    %788 = vmatprep.subr.bf16.mxu0 0
    %789 = vmatpush1.bf16.xpose.msra.mxu0 0
    %790 = vmatprep.mubr.bf16.mxu0 0
    %791 = vmatmul.mubr.bf16.gmra.mrb[0].mxu0 %v753
    %v792 = vpop.f32.mrb[0].mxu0
    %v793 = vadd.f32 0.0, %v792
    %v794 = vpop.f32.mrb[0].mxu0
    %v795 = vpop.f32.mrb[0].mxu0
    %v796 = vpop.f32.mrb[0].mxu0
    %797 = vdwg.mxu0
    %798 = vrot.lane.b32.xlu0 %v293, 96
    %v799 = vpop.permute.xlu0 %798
    %800 = vrot.lane.b32.xlu0 %v295, 96
    %v801 = vpop.permute.xlu0 %800
    %v803 = vsel %vm298, %v799, 0
    %v806 = vsel %vm298, %v801, 0
    %808 = vmatprep.subr.bf16.mxu0 0
    %809 = vmatpush1.bf16.xpose.msra.mxu0 %v806
    %810 = vmatprep.subr.bf16.mxu0 0
    %811 = vmatpush1.bf16.xpose.msra.mxu0 0
    %812 = vmatprep.subr.bf16.mxu0 0
    %813 = vmatpush1.bf16.xpose.msra.mxu0 0
    %814 = vmatprep.subr.bf16.mxu0 0
    %815 = vmatpush1.bf16.xpose.msra.mxu0 0
    %816 = vmatprep.subr.bf16.mxu0 0
    %817 = vmatpush1.bf16.xpose.msra.mxu0 0
    %818 = vmatprep.subr.bf16.mxu0 0
    %819 = vmatpush1.bf16.xpose.msra.mxu0 0
    %820 = vmatprep.subr.bf16.mxu0 0
    %821 = vmatpush1.bf16.xpose.msra.mxu0 0
    %822 = vmatprep.subr.bf16.mxu0 0
    %823 = vmatpush1.bf16.xpose.msra.mxu0 0
    %824 = vmatprep.subr.bf16.mxu0 0
    %825 = vmatpush1.bf16.xpose.msra.mxu0 0
    %826 = vmatprep.subr.bf16.mxu0 0
    %827 = vmatpush1.bf16.xpose.msra.mxu0 0
    %828 = vmatprep.subr.bf16.mxu0 0
    %829 = vmatpush1.bf16.xpose.msra.mxu0 0
    %830 = vmatprep.subr.bf16.mxu0 0
    %831 = vmatpush1.bf16.xpose.msra.mxu0 0
    %832 = vmatprep.subr.bf16.mxu0 0
    %833 = vmatpush1.bf16.xpose.msra.mxu0 0
    %834 = vmatprep.subr.bf16.mxu0 0
    %835 = vmatpush1.bf16.xpose.msra.mxu0 0
    %836 = vmatprep.subr.bf16.mxu0 0
    %837 = vmatpush1.bf16.xpose.msra.mxu0 0
    %838 = vmatprep.subr.bf16.mxu0 0
    %839 = vmatpush1.bf16.xpose.msra.mxu0 0
    %840 = vmatprep.mubr.bf16.mxu0 0
    %841 = vmatmul.mubr.bf16.gmra.mrb[0].mxu0 %v803
    %v842 = vpop.f32.mrb[0].mxu0
    %v843 = vadd.f32 0.0, %v842
    %v844 = vpop.f32.mrb[0].mxu0
    %v845 = vpop.f32.mrb[0].mxu0
    %v846 = vpop.f32.mrb[0].mxu0
    %847 = vdwg.mxu0
    %v848 = vsel %vm391, %v793, -inf
    %849 = vmax.xlane.f32.xlu0 %v848
    %v850 = vpop.xlane.xlu0 %849
    %v851 = vsel %vm391, %v843, -inf
    %852 = vmax.xlane.f32.xlu0 %v851
    %v853 = vpop.xlane.xlu0 %852
    %v854 = vsub.f32 %v793, %v850
    %v855 = vsub.f32 %v843, %v853
    %v856 = vmul.f32 %v854, 1.442695
    %v857 = vpow.pop %v856
    %v858 = vmul.f32 %v855, 1.442695
    %v859 = vpow.pop %v858
    %v860 = vsel %vm391, %v857, 0.0
    %861 = vadd.xlane.f32.xlu0 %v860
    %v862 = vpop.xlane.xlu0 %861
    %v863 = vsel %vm391, %v859, 0.0
    %864 = vadd.xlane.f32.xlu0 %v863
    %v865 = vpop.xlane.xlu0 %864
    %v866 = vpack.c.bf16 %v857, %v857
    %v867 = vpack.c.bf16 %v859, %v859
    %868 = vrot.lane.b32.xlu0 %v296, 96
    %v869 = vpop.permute.xlu0 %868
    %v871 = vsel %vm391, %v866, 0
    %v874 = vsel %vm415, %v869, 0
    %876 = vmatprep.subr.bf16.mxu0 0
    %877 = vmatpush1.bf16.msra.mxu0 %v874
    %878 = vmatprep.subr.bf16.mxu0 0
    %879 = vmatpush1.bf16.msra.mxu0 0
    %880 = vmatprep.subr.bf16.mxu0 0
    %881 = vmatpush1.bf16.msra.mxu0 0
    %882 = vmatprep.subr.bf16.mxu0 0
    %883 = vmatpush1.bf16.msra.mxu0 0
    %884 = vmatprep.subr.bf16.mxu0 0
    %885 = vmatpush1.bf16.msra.mxu0 0
    %886 = vmatprep.subr.bf16.mxu0 0
    %887 = vmatpush1.bf16.msra.mxu0 0
    %888 = vmatprep.subr.bf16.mxu0 0
    %889 = vmatpush1.bf16.msra.mxu0 0
    %890 = vmatprep.subr.bf16.mxu0 0
    %891 = vmatpush1.bf16.msra.mxu0 0
    %892 = vmatprep.subr.bf16.mxu0 0
    %893 = vmatpush1.bf16.msra.mxu0 0
    %894 = vmatprep.subr.bf16.mxu0 0
    %895 = vmatpush1.bf16.msra.mxu0 0
    %896 = vmatprep.subr.bf16.mxu0 0
    %897 = vmatpush1.bf16.msra.mxu0 0
    %898 = vmatprep.subr.bf16.mxu0 0
    %899 = vmatpush1.bf16.msra.mxu0 0
    %900 = vmatprep.subr.bf16.mxu0 0
    %901 = vmatpush1.bf16.msra.mxu0 0
    %902 = vmatprep.subr.bf16.mxu0 0
    %903 = vmatpush1.bf16.msra.mxu0 0
    %904 = vmatprep.subr.bf16.mxu0 0
    %905 = vmatpush1.bf16.msra.mxu0 0
    %906 = vmatprep.subr.bf16.mxu0 0
    %907 = vmatpush1.bf16.msra.mxu0 0
    %908 = vmatprep.mubr.bf16.mxu0 0
    %909 = vmatmul.mubr.bf16.gmra.mrb[0].mxu0 %v871
    %v910 = vpop.f32.mrb[0].mxu0
    %v911 = vadd.f32 0.0, %v910
    %v912 = vpop.f32.mrb[0].mxu0
    %v913 = vpop.f32.mrb[0].mxu0
    %v914 = vpop.f32.mrb[0].mxu0
    %915 = vdwg.mxu0
    %916 = vrot.lane.b32.xlu0 %v297, 96
    %v917 = vpop.permute.xlu0 %916
    %v919 = vsel %vm391, %v867, 0
    %v922 = vsel %vm415, %v917, 0
    %924 = vmatprep.subr.bf16.mxu0 0
    %925 = vmatpush1.bf16.msra.mxu0 %v922
    %926 = vmatprep.subr.bf16.mxu0 0
    %927 = vmatpush1.bf16.msra.mxu0 0
    %928 = vmatprep.subr.bf16.mxu0 0
    %929 = vmatpush1.bf16.msra.mxu0 0
    %930 = vmatprep.subr.bf16.mxu0 0
    %931 = vmatpush1.bf16.msra.mxu0 0
    %932 = vmatprep.subr.bf16.mxu0 0
    %933 = vmatpush1.bf16.msra.mxu0 0
    %934 = vmatprep.subr.bf16.mxu0 0
    %935 = vmatpush1.bf16.msra.mxu0 0
    %936 = vmatprep.subr.bf16.mxu0 0
    %937 = vmatpush1.bf16.msra.mxu0 0
    %938 = vmatprep.subr.bf16.mxu0 0
    %939 = vmatpush1.bf16.msra.mxu0 0
    %940 = vmatprep.subr.bf16.mxu0 0
    %941 = vmatpush1.bf16.msra.mxu0 0
    %942 = vmatprep.subr.bf16.mxu0 0
    %943 = vmatpush1.bf16.msra.mxu0 0
    %944 = vmatprep.subr.bf16.mxu0 0
    %945 = vmatpush1.bf16.msra.mxu0 0
    %946 = vmatprep.subr.bf16.mxu0 0
    %947 = vmatpush1.bf16.msra.mxu0 0
    %948 = vmatprep.subr.bf16.mxu0 0
    %949 = vmatpush1.bf16.msra.mxu0 0
    %950 = vmatprep.subr.bf16.mxu0 0
    %951 = vmatpush1.bf16.msra.mxu0 0
    %952 = vmatprep.subr.bf16.mxu0 0
    %953 = vmatpush1.bf16.msra.mxu0 0
    %954 = vmatprep.subr.bf16.mxu0 0
    %955 = vmatpush1.bf16.msra.mxu0 0
    %956 = vmatprep.mubr.bf16.mxu0 0
    %957 = vmatmul.mubr.bf16.gmra.mrb[0].mxu0 %v919
    %v958 = vpop.f32.mrb[0].mxu0
    %v959 = vadd.f32 0.0, %v958
    %v960 = vpop.f32.mrb[0].mxu0
    %v961 = vpop.f32.mrb[0].mxu0
    %v962 = vpop.f32.mrb[0].mxu0
    %963 = vdwg.mxu0
    %v964 = vrcp.pop %v862
    %v965 = vrcp.pop %v865
    %v966 = vmul.f32 %v911, %v964
    %v967 = vmul.f32 %v959, %v965
    %970 = vrot.lane.b32.xlu0 %v966, 32
    %v971 = vpop.permute.xlu0 %970
    %972 = vrot.lane.b32.xlu0 %v967, 32
    %v973 = vpop.permute.xlu0 %972
    %vm976 = vcmask 392448
    %977 = vst.msk [vmem:[#allocation2] sm:$0xff] %vm976, %v971
    %978 = vst.msk [vmem:[#allocation2 + $0x8] sm:$0xff] %vm976, %v973
    %979 = vrot.lane.b32.xlu0 %v292, 80
    %v980 = vpop.permute.xlu0 %979
    %981 = vrot.lane.b32.xlu0 %v294, 80
    %v982 = vpop.permute.xlu0 %981
    %v984 = vsel %vm298, %v980, 0
    %v987 = vsel %vm298, %v982, 0
    %989 = vmatprep.subr.bf16.mxu0 0
    %990 = vmatpush1.bf16.xpose.msra.mxu0 %v987
    %991 = vmatprep.subr.bf16.mxu0 0
    %992 = vmatpush1.bf16.xpose.msra.mxu0 0
    %993 = vmatprep.subr.bf16.mxu0 0
    %994 = vmatpush1.bf16.xpose.msra.mxu0 0
    %995 = vmatprep.subr.bf16.mxu0 0
    %996 = vmatpush1.bf16.xpose.msra.mxu0 0
    %997 = vmatprep.subr.bf16.mxu0 0
    %998 = vmatpush1.bf16.xpose.msra.mxu0 0
    %999 = vmatprep.subr.bf16.mxu0 0
    %1000 = vmatpush1.bf16.xpose.msra.mxu0 0
    %1001 = vmatprep.subr.bf16.mxu0 0
    %1002 = vmatpush1.bf16.xpose.msra.mxu0 0
    %1003 = vmatprep.subr.bf16.mxu0 0
    %1004 = vmatpush1.bf16.xpose.msra.mxu0 0
    %1005 = vmatprep.subr.bf16.mxu0 0
    %1006 = vmatpush1.bf16.xpose.msra.mxu0 0
    %1007 = vmatprep.subr.bf16.mxu0 0
    %1008 = vmatpush1.bf16.xpose.msra.mxu0 0
    %1009 = vmatprep.subr.bf16.mxu0 0
    %1010 = vmatpush1.bf16.xpose.msra.mxu0 0
    %1011 = vmatprep.subr.bf16.mxu0 0
    %1012 = vmatpush1.bf16.xpose.msra.mxu0 0
    %1013 = vmatprep.subr.bf16.mxu0 0
    %1014 = vmatpush1.bf16.xpose.msra.mxu0 0
    %1015 = vmatprep.subr.bf16.mxu0 0
    %1016 = vmatpush1.bf16.xpose.msra.mxu0 0
    %1017 = vmatprep.subr.bf16.mxu0 0
    %1018 = vmatpush1.bf16.xpose.msra.mxu0 0
    %1019 = vmatprep.subr.bf16.mxu0 0
    %1020 = vmatpush1.bf16.xpose.msra.mxu0 0
    %1021 = vmatprep.mubr.bf16.mxu0 0
    %1022 = vmatmul.mubr.bf16.gmra.mrb[0].mxu0 %v984
    %v1023 = vpop.f32.mrb[0].mxu0
    %v1024 = vadd.f32 0.0, %v1023
    %v1025 = vpop.f32.mrb[0].mxu0
    %v1026 = vpop.f32.mrb[0].mxu0
    %v1027 = vpop.f32.mrb[0].mxu0
    %1028 = vdwg.mxu0
    %1029 = vrot.lane.b32.xlu0 %v293, 80
    %v1030 = vpop.permute.xlu0 %1029
    %1031 = vrot.lane.b32.xlu0 %v295, 80
    %v1032 = vpop.permute.xlu0 %1031
    %v1034 = vsel %vm298, %v1030, 0
    %v1037 = vsel %vm298, %v1032, 0
    %1039 = vmatprep.subr.bf16.mxu0 0
    %1040 = vmatpush1.bf16.xpose.msra.mxu0 %v1037
    %1041 = vmatprep.subr.bf16.mxu0 0
    %1042 = vmatpush1.bf16.xpose.msra.mxu0 0
    %1043 = vmatprep.subr.bf16.mxu0 0
    %1044 = vmatpush1.bf16.xpose.msra.mxu0 0
    %1045 = vmatprep.subr.bf16.mxu0 0
    %1046 = vmatpush1.bf16.xpose.msra.mxu0 0
    %1047 = vmatprep.subr.bf16.mxu0 0
    %1048 = vmatpush1.bf16.xpose.msra.mxu0 0
    %1049 = vmatprep.subr.bf16.mxu0 0
    %1050 = vmatpush1.bf16.xpose.msra.mxu0 0
    %1051 = vmatprep.subr.bf16.mxu0 0
    %1052 = vmatpush1.bf16.xpose.msra.mxu0 0
    %1053 = vmatprep.subr.bf16.mxu0 0
    %1054 = vmatpush1.bf16.xpose.msra.mxu0 0
    %1055 = vmatprep.subr.bf16.mxu0 0
    %1056 = vmatpush1.bf16.xpose.msra.mxu0 0
    %1057 = vmatprep.subr.bf16.mxu0 0
    %1058 = vmatpush1.bf16.xpose.msra.mxu0 0
    %1059 = vmatprep.subr.bf16.mxu0 0
    %1060 = vmatpush1.bf16.xpose.msra.mxu0 0
    %1061 = vmatprep.subr.bf16.mxu0 0
    %1062 = vmatpush1.bf16.xpose.msra.mxu0 0
    %1063 = vmatprep.subr.bf16.mxu0 0
    %1064 = vmatpush1.bf16.xpose.msra.mxu0 0
    %1065 = vmatprep.subr.bf16.mxu0 0
    %1066 = vmatpush1.bf16.xpose.msra.mxu0 0
    %1067 = vmatprep.subr.bf16.mxu0 0
    %1068 = vmatpush1.bf16.xpose.msra.mxu0 0
    %1069 = vmatprep.subr.bf16.mxu0 0
    %1070 = vmatpush1.bf16.xpose.msra.mxu0 0
    %1071 = vmatprep.mubr.bf16.mxu0 0
    %1072 = vmatmul.mubr.bf16.gmra.mrb[0].mxu0 %v1034
    %v1073 = vpop.f32.mrb[0].mxu0
    %v1074 = vadd.f32 0.0, %v1073
    %v1075 = vpop.f32.mrb[0].mxu0
    %v1076 = vpop.f32.mrb[0].mxu0
    %v1077 = vpop.f32.mrb[0].mxu0
    %1078 = vdwg.mxu0
    %v1079 = vsel %vm391, %v1024, -inf
    %1080 = vmax.xlane.f32.xlu0 %v1079
    %v1081 = vpop.xlane.xlu0 %1080
    %v1082 = vsel %vm391, %v1074, -inf
    %1083 = vmax.xlane.f32.xlu0 %v1082
    %v1084 = vpop.xlane.xlu0 %1083
    %v1085 = vsub.f32 %v1024, %v1081
    %v1086 = vsub.f32 %v1074, %v1084
    %v1087 = vmul.f32 %v1085, 1.442695
    %v1088 = vpow.pop %v1087
    %v1089 = vmul.f32 %v1086, 1.442695
    %v1090 = vpow.pop %v1089
    %v1091 = vsel %vm391, %v1088, 0.0
    %1092 = vadd.xlane.f32.xlu0 %v1091
    %v1093 = vpop.xlane.xlu0 %1092
    %v1094 = vsel %vm391, %v1090, 0.0
    %1095 = vadd.xlane.f32.xlu0 %v1094
    %v1096 = vpop.xlane.xlu0 %1095
    %v1097 = vpack.c.bf16 %v1088, %v1088
    %v1098 = vpack.c.bf16 %v1090, %v1090
    %1099 = vrot.lane.b32.xlu0 %v296, 80
    %v1100 = vpop.permute.xlu0 %1099
    %v1102 = vsel %vm391, %v1097, 0
    %v1105 = vsel %vm415, %v1100, 0
    %1107 = vmatprep.subr.bf16.mxu0 0
    %1108 = vmatpush1.bf16.msra.mxu0 %v1105
    %1109 = vmatprep.subr.bf16.mxu0 0
    %1110 = vmatpush1.bf16.msra.mxu0 0
    %1111 = vmatprep.subr.bf16.mxu0 0
    %1112 = vmatpush1.bf16.msra.mxu0 0
    %1113 = vmatprep.subr.bf16.mxu0 0
    %1114 = vmatpush1.bf16.msra.mxu0 0
    %1115 = vmatprep.subr.bf16.mxu0 0
    %1116 = vmatpush1.bf16.msra.mxu0 0
    %1117 = vmatprep.subr.bf16.mxu0 0
    %1118 = vmatpush1.bf16.msra.mxu0 0
    %1119 = vmatprep.subr.bf16.mxu0 0
    %1120 = vmatpush1.bf16.msra.mxu0 0
    %1121 = vmatprep.subr.bf16.mxu0 0
    %1122 = vmatpush1.bf16.msra.mxu0 0
    %1123 = vmatprep.subr.bf16.mxu0 0
    %1124 = vmatpush1.bf16.msra.mxu0 0
    %1125 = vmatprep.subr.bf16.mxu0 0
    %1126 = vmatpush1.bf16.msra.mxu0 0
    %1127 = vmatprep.subr.bf16.mxu0 0
    %1128 = vmatpush1.bf16.msra.mxu0 0
    %1129 = vmatprep.subr.bf16.mxu0 0
    %1130 = vmatpush1.bf16.msra.mxu0 0
    %1131 = vmatprep.subr.bf16.mxu0 0
    %1132 = vmatpush1.bf16.msra.mxu0 0
    %1133 = vmatprep.subr.bf16.mxu0 0
    %1134 = vmatpush1.bf16.msra.mxu0 0
    %1135 = vmatprep.subr.bf16.mxu0 0
    %1136 = vmatpush1.bf16.msra.mxu0 0
    %1137 = vmatprep.subr.bf16.mxu0 0
    %1138 = vmatpush1.bf16.msra.mxu0 0
    %1139 = vmatprep.mubr.bf16.mxu0 0
    %1140 = vmatmul.mubr.bf16.gmra.mrb[0].mxu0 %v1102
    %v1141 = vpop.f32.mrb[0].mxu0
    %v1142 = vadd.f32 0.0, %v1141
    %v1143 = vpop.f32.mrb[0].mxu0
    %v1144 = vpop.f32.mrb[0].mxu0
    %v1145 = vpop.f32.mrb[0].mxu0
    %1146 = vdwg.mxu0
    %1147 = vrot.lane.b32.xlu0 %v297, 80
    %v1148 = vpop.permute.xlu0 %1147
    %v1150 = vsel %vm391, %v1098, 0
    %v1153 = vsel %vm415, %v1148, 0
    %1155 = vmatprep.subr.bf16.mxu0 0
    %1156 = vmatpush1.bf16.msra.mxu0 %v1153
    %1157 = vmatprep.subr.bf16.mxu0 0
    %1158 = vmatpush1.bf16.msra.mxu0 0
    %1159 = vmatprep.subr.bf16.mxu0 0
    %1160 = vmatpush1.bf16.msra.mxu0 0
    %1161 = vmatprep.subr.bf16.mxu0 0
    %1162 = vmatpush1.bf16.msra.mxu0 0
    %1163 = vmatprep.subr.bf16.mxu0 0
    %1164 = vmatpush1.bf16.msra.mxu0 0
    %1165 = vmatprep.subr.bf16.mxu0 0
    %1166 = vmatpush1.bf16.msra.mxu0 0
    %1167 = vmatprep.subr.bf16.mxu0 0
    %1168 = vmatpush1.bf16.msra.mxu0 0
    %1169 = vmatprep.subr.bf16.mxu0 0
    %1170 = vmatpush1.bf16.msra.mxu0 0
    %1171 = vmatprep.subr.bf16.mxu0 0
    %1172 = vmatpush1.bf16.msra.mxu0 0
    %1173 = vmatprep.subr.bf16.mxu0 0
    %1174 = vmatpush1.bf16.msra.mxu0 0
    %1175 = vmatprep.subr.bf16.mxu0 0
    %1176 = vmatpush1.bf16.msra.mxu0 0
    %1177 = vmatprep.subr.bf16.mxu0 0
    %1178 = vmatpush1.bf16.msra.mxu0 0
    %1179 = vmatprep.subr.bf16.mxu0 0
    %1180 = vmatpush1.bf16.msra.mxu0 0
    %1181 = vmatprep.subr.bf16.mxu0 0
    %1182 = vmatpush1.bf16.msra.mxu0 0
    %1183 = vmatprep.subr.bf16.mxu0 0
    %1184 = vmatpush1.bf16.msra.mxu0 0
    %1185 = vmatprep.subr.bf16.mxu0 0
    %1186 = vmatpush1.bf16.msra.mxu0 0
    %1187 = vmatprep.mubr.bf16.mxu0 0
    %1188 = vmatmul.mubr.bf16.gmra.mrb[0].mxu0 %v1150
    %v1189 = vpop.f32.mrb[0].mxu0
    %v1190 = vadd.f32 0.0, %v1189
    %v1191 = vpop.f32.mrb[0].mxu0
    %v1192 = vpop.f32.mrb[0].mxu0
    %v1193 = vpop.f32.mrb[0].mxu0
    %1194 = vdwg.mxu0
    %v1195 = vrcp.pop %v1093
    %v1196 = vrcp.pop %v1096
    %v1197 = vmul.f32 %v1142, %v1195
    %v1198 = vmul.f32 %v1190, %v1196
    %1201 = vrot.lane.b32.xlu0 %v1197, 48
    %v1202 = vpop.permute.xlu0 %1201
    %1203 = vrot.lane.b32.xlu0 %v1198, 48
    %v1204 = vpop.permute.xlu0 %1203
    %vm1207 = vcmask 523648
    %1208 = vst.msk [vmem:[#allocation2] sm:$0xff] %vm1207, %v1202
    %1209 = vst.msk [vmem:[#allocation2 + $0x8] sm:$0xff] %vm1207, %v1204
    %v1210 = vld [vmem:[#allocation2] sm:$0xff]
    %v1211 = vld [vmem:[#allocation2 + $0x8] sm:$0xff]
    %v1212 = vpack.c.bf16 %v1211, %v1210
    %v1213 = vld [vmem:[%s9] sm:$0xf]
    %v1214 = vld [vmem:[%s9 + $0x4] sm:$0xf]
    %v1215 = vld [vmem:[%s9 + $0x8] sm:$0xf]
    %v1216 = vld [vmem:[%s9 + $0xc] sm:$0xf]
    %v1217 = vld [vmem:[%s9 + $0x10] sm:$0xf]
    %v1218 = vld [vmem:[%s9 + $0x14] sm:$0xf]
    %v1219 = vld [vmem:[%s9 + $0x18] sm:$0xf]
    %v1220 = vld [vmem:[%s9 + $0x1c] sm:$0xf]
    %v1221 = vld [vmem:[%s10] sm:$0x1]
    %v1223 = vlaneseq
    %v1224 = vshrl.u32 %v1223, 7
    %v1225 = vsub.s32 0, %v1224
    %v1226 = vrot.slane %v1221, %v1225
    %v1236 = vunpack.c.l.b16 %v1213
    %v1237 = vunpack.c.l.b16 %v1214
    %v1238 = vunpack.c.l.b16 %v1215
    %v1239 = vunpack.c.l.b16 %v1216
    %v1240 = vunpack.c.l.b16 %v1217
    %v1241 = vunpack.c.l.b16 %v1218
    %v1242 = vunpack.c.l.b16 %v1219
    %v1243 = vunpack.c.l.b16 %v1220
    %v1244 = vpack.c.b16 %v1237, %v1236
    %v1245 = vpack.c.b16 %v1239, %v1238
    %v1246 = vpack.c.b16 %v1241, %v1240
    %v1247 = vpack.c.b16 %v1243, %v1242
    %vm1252 = vcmask 523264
    %v1254 = vsel %vm1252, %v1212, 0
    %1256 = vmatprep.subr.bf16.mxu0 0
    %1257 = vmatpush1.bf16.msra.mxu0 %v1244
    %1258 = vmatprep.subr.bf16.mxu0 0
    %1259 = vmatpush1.bf16.msra.mxu0 %v1245
    %1260 = vmatprep.subr.bf16.mxu0 0
    %1261 = vmatpush1.bf16.msra.mxu0 %v1246
    %1262 = vmatprep.subr.bf16.mxu0 0
    %1263 = vmatpush1.bf16.msra.mxu0 %v1247
    %1264 = vmatprep.subr.bf16.mxu0 0
    %1265 = vmatpush1.bf16.msra.mxu0 0
    %1266 = vmatprep.subr.bf16.mxu0 0
    %1267 = vmatpush1.bf16.msra.mxu0 0
    %1268 = vmatprep.subr.bf16.mxu0 0
    %1269 = vmatpush1.bf16.msra.mxu0 0
    %1270 = vmatprep.subr.bf16.mxu0 0
    %1271 = vmatpush1.bf16.msra.mxu0 0
    %1272 = vmatprep.subr.bf16.mxu0 0
    %1273 = vmatpush1.bf16.msra.mxu0 0
    %1274 = vmatprep.subr.bf16.mxu0 0
    %1275 = vmatpush1.bf16.msra.mxu0 0
    %1276 = vmatprep.subr.bf16.mxu0 0
    %1277 = vmatpush1.bf16.msra.mxu0 0
    %1278 = vmatprep.subr.bf16.mxu0 0
    %1279 = vmatpush1.bf16.msra.mxu0 0
    %1280 = vmatprep.subr.bf16.mxu0 0
    %1281 = vmatpush1.bf16.msra.mxu0 0
    %1282 = vmatprep.subr.bf16.mxu0 0
    %1283 = vmatpush1.bf16.msra.mxu0 0
    %1284 = vmatprep.subr.bf16.mxu0 0
    %1285 = vmatpush1.bf16.msra.mxu0 0
    %1286 = vmatprep.subr.bf16.mxu0 0
    %1287 = vmatpush1.bf16.msra.mxu0 0
    %1288 = vmatprep.mubr.bf16.mxu0 0
    %1289 = vmatmul.mubr.bf16.gmra.mrb[0].mxu0 %v1254
    %v1290 = vpop.f32.mrb[0].mxu0
    %v1291 = vadd.f32 %v1226, %v1290
    %v1292 = vpop.f32.mrb[0].mxu0
    %v1293 = vpop.f32.mrb[0].mxu0
    %v1294 = vadd.f32 %v1226, %v1293
    %v1295 = vpop.f32.mrb[0].mxu0
    %1296 = vdwg.mxu0
    %1297 = vst.msk [vmem:[#allocation9] sm:$0xff] %vm113, %v1291
    %1298 = vst.msk [vmem:[#allocation9 + $0x8] sm:$0xff] %vm113, %v1294
    // Predicated region
    $region58: #{tpu_custom_call.1} parent=1 // pred_check
      _
    $region59: #{tpu_custom_call.1} parent=1 // pred_check_branch
      %1300 = sbr.rel (0) target = $region61
    $region60: #{tpu_custom_call.1} parent=1 // pred_region
      %s1302 = ssub.s32 256, 256
      %1303 = vsyncadd [#allocation5], %s1302
      %s1304 = sshll.u32 [#allocation9], 4
      %s1305 = int_to_ptr.vmem [resolvable:$true] %s1304
      %1310 = dma.vmem_to_hbm [thread:$0]  %s1305, 256, %s11, [#allocation5], 128, 128, 8
    $region61: #{tpu_custom_call.1} parent=1 // pred_fallthru
      _
    // Predicated region
    $region62: #{tpu_custom_call.1} parent=1 // pred_check
      _
    $region63: #{tpu_custom_call.1} parent=1 // pred_check_branch
      %1312 = sbr.rel (0) target = $region65
    $region64: #{tpu_custom_call.1} parent=1 // pred_region
      %1313 = dma.done [#allocation5], 256
    $region65: #{tpu_custom_call.1} parent=1 // pred_fallthru
      _
    %1314 = vsyncpa [#allocation4], 1
    %1315 = vsyncpa [#allocation7], 1
    %1316 = vsyncpa [#allocation5], 1

</llo_original>
